<compile_context>
chip_gen: v6e
topology: v6e:2x2x1
jax: 0.10.0
libtpu: 0.0.40
codegen_flags: <defaults>
</compile_context>

<pallas_src>
import functools

import jax
import jax.numpy as jnp
from jax.experimental import pallas as pl
from jax.experimental.pallas import tpu as pltpu

LANE = 128


def _round_up(n, m):
    return ((n + m - 1) // m) * m


def _vmem_limit_bytes():
    try:
        kind = jax.devices()[0].device_kind.lower()
    except Exception:
        kind = ""
    if any(v in kind for v in ("v4", "v5", "v6")):
        return 96 * 1024 * 1024        # 128 MiB physical VMEM -> allow big tiles
    return 48 * 1024 * 1024            # v7x-class: 64 MiB physical VMEM


def _choose_tile_h(H, W, Mp, p, budget_bytes):
    # Stage 1 holds roughly 4 live f32 (TH+2p, W, Mp)-sized values.
    for th in sorted((d for d in range(1, H + 1) if H % d == 0), reverse=True):
        if 4 * (th + 2 * p) * W * Mp * 4 <= budget_bytes:
            return th
    return 1


def _const_spec(shape, index_map):
    """BlockSpec for a grid-invariant operand: single-buffer it."""
    try:
        return pl.BlockSpec(shape, index_map, pipeline_mode=pl.Buffered(1))
    except Exception:                       # older jax without pipeline_mode
        return pl.BlockSpec(shape, index_map)


# ----------------------------- stage 1 kernel -------------------------------
def _mbconv_stage1_kernel(x_ref, w1_ref, b1_ref, dwk_ref, b2_ref,
                          h_ref, gap_ref, *, H, W, K, TH, expand):
    p = (K - 1) // 2
    HT = TH + 2 * p
    Mp = dwk_ref.shape[-1]
    i = pl.program_id(1)
    r0 = pl.multiple_of(i * TH, TH)

    # Halo'd row window of the (H-zero-padded) input resident in VMEM per batch.
    xh = x_ref[0, pl.ds(r0, HT)]                       # (HT, W, Cin_k) f32

    if expand:
        # pointwise1 (BN scale folded into w1) + Swish on the MXU in bf16.
        h2 = jnp.dot(xh.reshape(HT * W, xh.shape[-1]).astype(jnp.bfloat16),
                     w1_ref[...], preferred_element_type=jnp.float32)
        h2 = h2 + b1_ref[...]
        h2 = h2 * jax.nn.sigmoid(h2)                   # Swish
        # Zero halo rows that fall outside the image: SAME padding pads the
        # depthwise *input* with zeros, but Swish(bias) of a zero row is not 0.
        m = jax.lax.broadcasted_iota(jnp.int32, (HT * W, 1), 0)
        lo = (p - i * TH) * W
        hi = (H + p - i * TH) * W
        h2 = jnp.where((m >= lo) & (m < hi), h2, 0.0)
        hh = h2.reshape(HT, W, Mp)
    else:
        hh = xh        # nn.Identity(); halo rows already zero in the padded x.

    # --- depthwise KxK, stride 1, SAME (BN scale folded into dwk) ---
    # W shifts via pltpu.roll + small (W, 1) border masks; H shifts via static
    # slices of the halo'd tile; center tap initialises the accumulator.
    # TODO(synk): on v6e/v7x run the tap multiplies in bf16 (f32 accumulate)
    # once bf16 sublane roll/select is verified on the target Mosaic version.
    dwk = dwk_ref[...]                                 # (K, K, Mp) f32
    col = jax.lax.broadcasted_iota(jnp.int32, (W, 1), 0)
    wmask = {dw: (col + dw >= 0) & (col + dw < W)
             for dw in range(-p, p + 1) if dw != 0}
    acc = hh[p:p + TH] * dwk[p, p].reshape(1, 1, Mp)   # center tap
    for dw in range(-p, p + 1):
        if dw == 0:
            hw = hh
        else:
            hw = pltpu.roll(hh, shift=(-dw) % W, axis=1)   # hw[:, j] = hh[:, (j+dw) % W]
            hw = jnp.where(wmask[dw], hw, 0.0)
        for dh in range(-p, p + 1):
            if dh == 0 and dw == 0:
                continue                                   # already in acc
            acc = acc + hw[p + dh:p + dh + TH] * dwk[dh + p, dw + p].reshape(1, 1, Mp)
    hdw = acc + b2_ref[...].reshape(1, 1, Mp)
    hdw = hdw * jax.nn.sigmoid(hdw)                        # Swish

    # Per-tile GAP partial sums (reduced + run through the tiny SE MLP in JAX).
    gap_ref[0, 0] = jnp.sum(hdw.reshape(TH * W, Mp), axis=0, keepdims=True)
    # Intermediate activation for stage 2, stored to HBM in bf16.
    h_ref[0] = hdw.astype(h_ref.dtype)


# ----------------------------- stage 2 kernel -------------------------------
def _mbconv_stage2_kernel(h_ref, se_ref, w2_ref, b3_ref, *refs, TH, W, skip):
    if skip:
        x_ref, o_ref = refs
    else:
        (o_ref,) = refs
    Mp, Op = w2_ref.shape
    # Fold the SE scale into w2's rows: Mp*Op multiplies instead of H*W*Mp.
    w2s = (se_ref[0] * w2_ref[...]).astype(jnp.bfloat16)   # (Mp,1)*(Mp,Op) -> bf16
    out = jnp.dot(h_ref[0].reshape(TH * W, Mp), w2s,
                  preferred_element_type=jnp.float32)
    out = (out + b3_ref[...]).reshape(TH, W, Op)
    if skip:                                               # static Python flag
        out = out + x_ref[0]        # residual tile (channel-padded to Op lanes)
    o_ref[0] = out.astype(o_ref.dtype)


# --------------------------------- wrapper ----------------------------------
def _bn_scale_shift(gamma, beta, mean, var, eps=1e-5):
    scale = gamma / jnp.sqrt(var + eps)
    shift = beta - mean * scale
    return scale[None, :], shift[None, :]                   # (1, C) each


def make_params(key, Cin, Cout, expan, K, se_ratio=4):
    mid = expan * Cin
    sq = max(int(Cin / se_ratio), 1)
    ks = jax.random.split(key, 16)

    def bn(k, c):
        k1, k2, k3, k4 = jax.random.split(k, 4)
        gamma = 1.0 + 0.1 * jax.random.normal(k1, (c,), jnp.float32)
        beta = 0.1 * jax.random.normal(k2, (c,), jnp.float32)
        mean = 0.1 * jax.random.normal(k3, (c,), jnp.float32)
        var = jax.random.uniform(k4, (c,), jnp.float32, 0.5, 1.5)
        return _bn_scale_shift(gamma, beta, mean, var)

    p = {}
    p["w1"] = 0.2 * jax.random.normal(ks[0], (Cin, mid), jnp.float32)
    p["s1"], p["b1"] = bn(ks[1], mid)
    p["dwk"] = 0.2 * jax.random.normal(ks[2], (K, K, mid), jnp.float32)
    p["s2"], p["b2"] = bn(ks[3], mid)
    p["wse1"] = 0.2 * jax.random.normal(ks[4], (mid, sq), jnp.float32)
    p["bse1"] = 0.1 * jax.random.normal(ks[5], (1, sq), jnp.float32)
    p["wse2"] = 0.2 * jax.random.normal(ks[6], (sq, mid), jnp.float32)
    p["bse2"] = 0.1 * jax.random.normal(ks[7], (1, mid), jnp.float32)
    p["w2"] = 0.2 * jax.random.normal(ks[8], (mid, Cout), jnp.float32)
    p["s3"], p["b3"] = bn(ks[9], Cout)
    return p, mid, sq


def mbconv_pallas(x_nchw, params, *, Cout, expan, K, stride=1, is_skip=True,
                  tile_h=None):
    assert stride == 1, "kernel implements the stride-1 configuration"
    # TODO(synk): stride > 1 / even kernel sizes of SameConv not implemented.
    assert K % 2 == 1, "odd kernel sizes only"
    B, Cin, H, W = x_nchw.shape
    mid = expan * Cin
    p = (K - 1) // 2
    skip = bool(is_skip and (Cin == Cout) and (stride == 1))
    expand = expan != 1

    Mp = _round_up(mid, LANE)
    Op = _round_up(Cout, LANE)

    vmem_limit = _vmem_limit_bytes()
    if tile_h is None:
        tile_h = _choose_tile_h(H, W, Mp, p, vmem_limit // 3)
    # TODO(synk): handle H % tile_h != 0 with a remainder tile.
    assert H % tile_h == 0, "H must be divisible by tile_h"
    nH = H // tile_h

    # Fold eval-mode BN scales into the conv weights (shift-only in kernel).
    w1f = (params["w1"] * params["s1"]).astype(jnp.bfloat16)        # (Cin, mid)
    dwkf = params["dwk"] * params["s2"].reshape(1, 1, mid)          # (K, K, mid)
    w2f = params["w2"] * params["s3"]                               # (mid, Cout) f32

    def pad2(a, r, c):
        return jnp.pad(a, ((0, r - a.shape[0]), (0, c - a.shape[1])))

    # NCHW -> NHWC (module contract is NCHW; keep the network NHWC end-to-end
    # in a real pipeline to avoid this transpose).
    x_nhwc = jnp.transpose(x_nchw, (0, 2, 3, 1))

    # Stage-1 input: zero-pad H by p for the depthwise halo.  Channels stay at
    # the true Cin (no 128-lane HBM padding of the pw1 input); only the
    # expan == 1 path (x feeds the depthwise directly) needs lane padding.
    cin_k = Cin if expand else Mp
    x1 = jnp.pad(x_nhwc, ((0, 0), (p, p), (0, 0), (0, cin_k - Cin)))

    w1p = pad2(w1f, Cin, Mp)
    b1p = pad2(params["b1"], 1, Mp)
    dwkp = jnp.pad(dwkf, ((0, 0), (0, 0), (0, Mp - mid)))
    b2p = pad2(params["b2"], 1, Mp)

    k1 = functools.partial(_mbconv_stage1_kernel,
                           H=H, W=W, K=K, TH=tile_h, expand=expand)
    h_bf16, gap_part = pl.pallas_call(
        k1,
        out_shape=(jax.ShapeDtypeStruct((B, H, W, Mp), jnp.bfloat16),
                   jax.ShapeDtypeStruct((B, nH, 1, Mp), jnp.float32)),
        grid_spec=pltpu.PrefetchScalarGridSpec(
            num_scalar_prefetch=0,
            grid=(B, nH),
            in_specs=[
                pl.BlockSpec((1, H + 2 * p, W, cin_k), lambda b, i: (b, 0, 0, 0)),
                _const_spec((Cin, Mp), lambda b, i: (0, 0)),          # w1 (bf16)
                _const_spec((1, Mp), lambda b, i: (0, 0)),            # b1
                _const_spec((K, K, Mp), lambda b, i: (0, 0, 0)),      # dwk
                _const_spec((1, Mp), lambda b, i: (0, 0)),            # b2
            ],
            out_specs=[
                pl.BlockSpec((1, tile_h, W, Mp), lambda b, i: (b, i, 0, 0)),
                pl.BlockSpec((1, 1, 1, Mp), lambda b, i: (b, i, 0, 0)),
            ],
        ),
        compiler_params=pltpu.CompilerParams(
            dimension_semantics=("parallel", "parallel"),
            vmem_limit_bytes=vmem_limit,
        ),
    )(x1, w1p, b1p, dwkp, b2p)

    # ---- tiny SE MLP on (B, mid) in plain JAX between the two calls ----
    gap = gap_part[:, :, 0, :mid].sum(axis=1) / float(H * W)        # (B, mid)
    se = gap @ params["wse1"] + params["bse1"]
    se = se * jax.nn.sigmoid(se)                                    # Swish
    se = jax.nn.sigmoid(se @ params["wse2"] + params["bse2"])       # (B, mid)
    se_col = jnp.pad(se, ((0, 0), (0, Mp - mid)))[:, :, None]       # (B, Mp, 1)

    w2p = pad2(w2f, Mp, Op)
    b3p = pad2(params["b3"], 1, Op)

    k2 = functools.partial(_mbconv_stage2_kernel, TH=tile_h, W=W, skip=skip)
    in_specs = [
        pl.BlockSpec((1, tile_h, W, Mp), lambda b, i: (b, i, 0, 0)),  # h (bf16)
        pl.BlockSpec((1, Mp, 1), lambda b, i: (b, 0, 0)),             # se scale
        _const_spec((Mp, Op), lambda b, i: (0, 0)),                   # w2 (f32)
        _const_spec((1, Op), lambda b, i: (0, 0)),                    # b3
    ]
    args = [h_bf16, se_col, w2p, b3p]
    if skip:
        # Residual read for the skip add, lane-padded to Op (skip implies
        # Cin == Cout).  TODO(synk): pad the residual to lanes in-kernel
        # instead to avoid this HBM pad pass.
        x2 = jnp.pad(x_nhwc, ((0, 0), (0, 0), (0, 0), (0, Op - Cin)))
        in_specs.append(pl.BlockSpec((1, tile_h, W, Op), lambda b, i: (b, i, 0, 0)))
        args.append(x2)

    out_nhwc = pl.pallas_call(
        k2,
        out_shape=jax.ShapeDtypeStruct((B, H, W, Op), x_nhwc.dtype),
        grid_spec=pltpu.PrefetchScalarGridSpec(
            num_scalar_prefetch=0,
            grid=(B, nH),
            in_specs=in_specs,
            out_specs=pl.BlockSpec((1, tile_h, W, Op), lambda b, i: (b, i, 0, 0)),
        ),
        compiler_params=pltpu.CompilerParams(
            dimension_semantics=("parallel", "parallel"),
            vmem_limit_bytes=vmem_limit,
        ),
    )(*args)

    return jnp.transpose(out_nhwc[..., :Cout], (0, 3, 1, 2))         # NHWC -> NCHW


def mbconv_ref(x_nchw, p, *, Cout, expan, K, is_skip=True):
    """Pure-JAX f32 reference (for correctness check)."""
    x = jnp.transpose(x_nchw, (0, 2, 3, 1))
    B, H, W, Cin = x.shape
    mid = expan * Cin
    h = x
    if expan != 1:
        h = jnp.einsum("bhwc,cm->bhwm", h, p["w1"]) * p["s1"] + p["b1"]
        h = h * jax.nn.sigmoid(h)
    h = jax.lax.conv_general_dilated(
        h, p["dwk"].reshape(K, K, 1, mid), window_strides=(1, 1), padding="SAME",
        dimension_numbers=("NHWC", "HWIO", "NHWC"), feature_group_count=mid)
    h = h * p["s2"] + p["b2"]
    h = h * jax.nn.sigmoid(h)
    gap = jnp.mean(h, axis=(1, 2))                        # (B, mid)
    se = gap @ p["wse1"] + p["bse1"]
    se = se * jax.nn.sigmoid(se)
    se = se @ p["wse2"] + p["bse2"]
    se = jax.nn.sigmoid(se)
    h = h * se[:, None, None, :]
    h = jnp.einsum("bhwm,mo->bhwo", h, p["w2"]) * p["s3"] + p["b3"]
    if is_skip and Cin == Cout:
        h = h + x
    return jnp.transpose(h, (0, 3, 1, 2))


if __name__ == "__main__":
    key = jax.random.PRNGKey(0)
    k_x, k_p = jax.random.split(key)

    B, Cin, H, W = 2, 4, 16, 16
    Cout, expan, K, stride = 4, 2, 3, 1                    # skip path active

    x = jax.random.normal(k_x, (B, Cin, H, W), jnp.float32)
    params, mid, sq = make_params(k_p, Cin, Cout, expan, K)

    ref = mbconv_ref(x, params, Cout=Cout, expan=expan, K=K)

    # Exercise both the H-tiled path (2 tiles of 8 rows, 1-row halo) and the
    # whole-image path.
    for th in (8, 16):
        out = mbconv_pallas(x, params, Cout=Cout, expan=expan, K=K,
                            stride=stride, tile_h=th)
        out = jax.block_until_ready(out)
        assert out.shape == (B, Cout, H, W)
        err = float(jnp.max(jnp.abs(out - ref)))
        # bf16 MXU operands + bf16 intermediate h loosen precision vs f32 ref.
        assert jnp.allclose(out, ref, atol=5e-2, rtol=5e-2), err
    print("KERNEL_OK")
</pallas_src>

<mosaic_0001>
module attributes {stable_mosaic.version = 11 : i64} {
  func.func @_mbconv_stage1_kernel(%arg0: i32, %arg1: i32, %arg2: memref<1x18x16x4xf32, #tpu.memory_space<vmem>>, %arg3: memref<4x128xbf16, #tpu.memory_space<vmem>>, %arg4: memref<1x128xf32, #tpu.memory_space<vmem>>, %arg5: memref<3x3x128xf32, #tpu.memory_space<vmem>>, %arg6: memref<1x128xf32, #tpu.memory_space<vmem>>, %arg7: memref<1x8x16x128xbf16, #tpu.memory_space<vmem>>, %arg8: memref<1x1x1x128xf32, #tpu.memory_space<vmem>>) attributes {dimension_semantics = [#tpu.dimension_semantics<parallel>, #tpu.dimension_semantics<parallel>], iteration_bounds = array<i64: 2, 2>, scalar_prefetch = 0 : i64, scratch_operands = 0 : i64, tpu.core_type = #tpu.core_type<tc>, window_params = [{transform_indices = @transform_0, window_bounds = array<i64: 1, 18, 16, 4>}, {pipeline_mode = #tpu.pipeline_mode<synchronous>, transform_indices = @transform_1, window_bounds = array<i64: 4, 128>}, {pipeline_mode = #tpu.pipeline_mode<synchronous>, transform_indices = @transform_2, window_bounds = array<i64: 1, 128>}, {pipeline_mode = #tpu.pipeline_mode<synchronous>, transform_indices = @transform_3, window_bounds = array<i64: 3, 3, 128>}, {pipeline_mode = #tpu.pipeline_mode<synchronous>, transform_indices = @transform_4, window_bounds = array<i64: 1, 128>}, {transform_indices = @transform_5, window_bounds = array<i64: 1, 8, 16, 128>}, {transform_indices = @transform_6, window_bounds = array<i64: 1, 1, 1, 128>}]} {
    %c8_i32 = arith.constant 8 : i32
    %0 = arith.muli %arg1, %c8_i32 : i32
    %1 = tpu.assume_multiple %0, 8 : i32
    %c0 = arith.constant 0 : index
    %2 = arith.index_cast %1 : i32 to index
    %c0_0 = arith.constant 0 : index
    %c0_1 = arith.constant 0 : index
    %3 = vector.load %arg2[%c0, %2, %c0_0, %c0_1] : memref<1x18x16x4xf32, #tpu.memory_space<vmem>>, vector<1x10x16x4xf32>
    %4 = vector.shape_cast %3 : vector<1x10x16x4xf32> to vector<10x16x4xf32>
    %5 = vector.shape_cast %4 : vector<10x16x4xf32> to vector<160x4xf32>
    %6 = arith.truncf %5 : vector<160x4xf32> to vector<160x4xbf16>
    %c0_2 = arith.constant 0 : index
    %c0_3 = arith.constant 0 : index
    %7 = vector.load %arg3[%c0_2, %c0_3] : memref<4x128xbf16, #tpu.memory_space<vmem>>, vector<4x128xbf16>
    %cst = arith.constant dense<0.000000e+00> : vector<160x128xf32>
    %8 = tpu.matmul %6, %7, %cst {dimension_numbers = #tpu.dot_dimension_numbers<[1], [0], [0], [1], [0, 0, 1, 1], [], []>} : vector<160x4xbf16>, vector<4x128xbf16>, vector<160x128xf32> -> vector<160x128xf32>
    %c0_4 = arith.constant 0 : index
    %c0_5 = arith.constant 0 : index
    %9 = vector.load %arg4[%c0_4, %c0_5] : memref<1x128xf32, #tpu.memory_space<vmem>>, vector<1x128xf32>
    %10 = vector.broadcast %9 : vector<1x128xf32> to vector<160x128xf32>
    %11 = arith.addf %8, %10 : vector<160x128xf32>
    %12 = arith.negf %11 : vector<160x128xf32>
    %13 = math.exp %12 : vector<160x128xf32>
    %cst_6 = arith.constant 1.000000e+00 : f32
    %14 = vector.broadcast %cst_6 : f32 to vector<160x128xf32>
    %15 = arith.addf %14, %13 : vector<160x128xf32>
    %16 = arith.divf %14, %15 : vector<160x128xf32>
    %17 = arith.mulf %11, %16 : vector<160x128xf32>
    %18 = tpu.iota {dimensions = array<i32: 0>} : vector<160x1xi32>
    %c8_i32_7 = arith.constant 8 : i32
    %19 = arith.muli %arg1, %c8_i32_7 : i32
    %c1_i32 = arith.constant 1 : i32
    %20 = arith.subi %c1_i32, %19 : i32
    %c16_i32 = arith.constant 16 : i32
    %21 = arith.muli %20, %c16_i32 : i32
    %c8_i32_8 = arith.constant 8 : i32
    %22 = arith.muli %arg1, %c8_i32_8 : i32
    %c17_i32 = arith.constant 17 : i32
    %23 = arith.subi %c17_i32, %22 : i32
    %c16_i32_9 = arith.constant 16 : i32
    %24 = arith.muli %23, %c16_i32_9 : i32
    %25 = vector.broadcast %21 : i32 to vector<160x1xi32>
    %26 = arith.cmpi sge, %18, %25 : vector<160x1xi32>
    %27 = vector.broadcast %24 : i32 to vector<160x1xi32>
    %28 = arith.cmpi slt, %18, %27 : vector<160x1xi32>
    %29 = arith.andi %26, %28 : vector<160x1xi1>
    %cst_10 = arith.constant 0.000000e+00 : f32
    %30 = vector.shape_cast %29 : vector<160x1xi1> to vector<160x1xi1>
    %31 = vector.broadcast %30 : vector<160x1xi1> to vector<160x128xi1>
    %32 = vector.broadcast %cst_10 : f32 to vector<160x128xf32>
    %33 = arith.select %31, %17, %32 : vector<160x128xi1>, vector<160x128xf32>
    %34 = vector.shape_cast %33 : vector<160x128xf32> to vector<10x16x128xf32>
    %c0_11 = arith.constant 0 : index
    %c0_12 = arith.constant 0 : index
    %c0_13 = arith.constant 0 : index
    %35 = vector.load %arg5[%c0_11, %c0_12, %c0_13] : memref<3x3x128xf32, #tpu.memory_space<vmem>>, vector<3x3x128xf32>
    %36 = tpu.iota {dimensions = array<i32: 0>} : vector<16x1xi32>
    %c-1_i32 = arith.constant -1 : i32
    %37 = vector.broadcast %c-1_i32 : i32 to vector<16x1xi32>
    %38 = arith.addi %36, %37 : vector<16x1xi32>
    %c0_i32 = arith.constant 0 : i32
    %39 = vector.broadcast %c0_i32 : i32 to vector<16x1xi32>
    %40 = arith.cmpi sge, %38, %39 : vector<16x1xi32>
    %c-1_i32_14 = arith.constant -1 : i32
    %41 = vector.broadcast %c-1_i32_14 : i32 to vector<16x1xi32>
    %42 = arith.addi %36, %41 : vector<16x1xi32>
    %c16_i32_15 = arith.constant 16 : i32
    %43 = vector.broadcast %c16_i32_15 : i32 to vector<16x1xi32>
    %44 = arith.cmpi slt, %42, %43 : vector<16x1xi32>
    %45 = arith.andi %40, %44 : vector<16x1xi1>
    %c1_i32_16 = arith.constant 1 : i32
    %46 = vector.broadcast %c1_i32_16 : i32 to vector<16x1xi32>
    %47 = arith.addi %36, %46 : vector<16x1xi32>
    %c0_i32_17 = arith.constant 0 : i32
    %48 = vector.broadcast %c0_i32_17 : i32 to vector<16x1xi32>
    %49 = arith.cmpi sge, %47, %48 : vector<16x1xi32>
    %c1_i32_18 = arith.constant 1 : i32
    %50 = vector.broadcast %c1_i32_18 : i32 to vector<16x1xi32>
    %51 = arith.addi %36, %50 : vector<16x1xi32>
    %c16_i32_19 = arith.constant 16 : i32
    %52 = vector.broadcast %c16_i32_19 : i32 to vector<16x1xi32>
    %53 = arith.cmpi slt, %51, %52 : vector<16x1xi32>
    %54 = arith.andi %49, %53 : vector<16x1xi1>
    %55 = vector.extract_strided_slice %34 {offsets = [1, 0, 0], sizes = [8, 16, 128], strides = [1, 1, 1]} : vector<10x16x128xf32> to vector<8x16x128xf32>
    %56 = vector.extract_strided_slice %35 {offsets = [1, 1, 0], sizes = [1, 1, 128], strides = [1, 1, 1]} : vector<3x3x128xf32> to vector<1x1x128xf32>
    %57 = vector.shape_cast %56 : vector<1x1x128xf32> to vector<128xf32>
    %58 = vector.shape_cast %57 : vector<128xf32> to vector<1x1x128xf32>
    %59 = vector.broadcast %58 : vector<1x1x128xf32> to vector<8x16x128xf32>
    %60 = arith.mulf %55, %59 : vector<8x16x128xf32>
    %c1_i32_20 = arith.constant 1 : i32
    %61 = tpu.dynamic_rotate %34 by %c1_i32_20 dim 1 : vector<10x16x128xf32>, i32 -> vector<10x16x128xf32>
    %cst_21 = arith.constant 0.000000e+00 : f32
    %62 = vector.shape_cast %45 : vector<16x1xi1> to vector<1x16x1xi1>
    %63 = vector.broadcast %62 : vector<1x16x1xi1> to vector<10x16x128xi1>
    %64 = vector.broadcast %cst_21 : f32 to vector<10x16x128xf32>
    %65 = arith.select %63, %61, %64 : vector<10x16x128xi1>, vector<10x16x128xf32>
    %66 = vector.extract_strided_slice %65 {offsets = [0, 0, 0], sizes = [8, 16, 128], strides = [1, 1, 1]} : vector<10x16x128xf32> to vector<8x16x128xf32>
    %67 = vector.extract_strided_slice %35 {offsets = [0, 0, 0], sizes = [1, 1, 128], strides = [1, 1, 1]} : vector<3x3x128xf32> to vector<1x1x128xf32>
    %68 = vector.shape_cast %67 : vector<1x1x128xf32> to vector<128xf32>
    %69 = vector.shape_cast %68 : vector<128xf32> to vector<1x1x128xf32>
    %70 = vector.broadcast %69 : vector<1x1x128xf32> to vector<8x16x128xf32>
    %71 = arith.mulf %66, %70 : vector<8x16x128xf32>
    %72 = arith.addf %60, %71 : vector<8x16x128xf32>
    %73 = vector.extract_strided_slice %65 {offsets = [1, 0, 0], sizes = [8, 16, 128], strides = [1, 1, 1]} : vector<10x16x128xf32> to vector<8x16x128xf32>
    %74 = vector.extract_strided_slice %35 {offsets = [1, 0, 0], sizes = [1, 1, 128], strides = [1, 1, 1]} : vector<3x3x128xf32> to vector<1x1x128xf32>
    %75 = vector.shape_cast %74 : vector<1x1x128xf32> to vector<128xf32>
    %76 = vector.shape_cast %75 : vector<128xf32> to vector<1x1x128xf32>
    %77 = vector.broadcast %76 : vector<1x1x128xf32> to vector<8x16x128xf32>
    %78 = arith.mulf %73, %77 : vector<8x16x128xf32>
    %79 = arith.addf %72, %78 : vector<8x16x128xf32>
    %80 = vector.extract_strided_slice %65 {offsets = [2, 0, 0], sizes = [8, 16, 128], strides = [1, 1, 1]} : vector<10x16x128xf32> to vector<8x16x128xf32>
    %81 = vector.extract_strided_slice %35 {offsets = [2, 0, 0], sizes = [1, 1, 128], strides = [1, 1, 1]} : vector<3x3x128xf32> to vector<1x1x128xf32>
    %82 = vector.shape_cast %81 : vector<1x1x128xf32> to vector<128xf32>
    %83 = vector.shape_cast %82 : vector<128xf32> to vector<1x1x128xf32>
    %84 = vector.broadcast %83 : vector<1x1x128xf32> to vector<8x16x128xf32>
    %85 = arith.mulf %80, %84 : vector<8x16x128xf32>
    %86 = arith.addf %79, %85 : vector<8x16x128xf32>
    %87 = vector.extract_strided_slice %34 {offsets = [0, 0, 0], sizes = [8, 16, 128], strides = [1, 1, 1]} : vector<10x16x128xf32> to vector<8x16x128xf32>
    %88 = vector.extract_strided_slice %35 {offsets = [0, 1, 0], sizes = [1, 1, 128], strides = [1, 1, 1]} : vector<3x3x128xf32> to vector<1x1x128xf32>
    %89 = vector.shape_cast %88 : vector<1x1x128xf32> to vector<128xf32>
    %90 = vector.shape_cast %89 : vector<128xf32> to vector<1x1x128xf32>
    %91 = vector.broadcast %90 : vector<1x1x128xf32> to vector<8x16x128xf32>
    %92 = arith.mulf %87, %91 : vector<8x16x128xf32>
    %93 = arith.addf %86, %92 : vector<8x16x128xf32>
    %94 = vector.extract_strided_slice %34 {offsets = [2, 0, 0], sizes = [8, 16, 128], strides = [1, 1, 1]} : vector<10x16x128xf32> to vector<8x16x128xf32>
    %95 = vector.extract_strided_slice %35 {offsets = [2, 1, 0], sizes = [1, 1, 128], strides = [1, 1, 1]} : vector<3x3x128xf32> to vector<1x1x128xf32>
    %96 = vector.shape_cast %95 : vector<1x1x128xf32> to vector<128xf32>
    %97 = vector.shape_cast %96 : vector<128xf32> to vector<1x1x128xf32>
    %98 = vector.broadcast %97 : vector<1x1x128xf32> to vector<8x16x128xf32>
    %99 = arith.mulf %94, %98 : vector<8x16x128xf32>
    %100 = arith.addf %93, %99 : vector<8x16x128xf32>
    %c15_i32 = arith.constant 15 : i32
    %101 = tpu.dynamic_rotate %34 by %c15_i32 dim 1 : vector<10x16x128xf32>, i32 -> vector<10x16x128xf32>
    %cst_22 = arith.constant 0.000000e+00 : f32
    %102 = vector.shape_cast %54 : vector<16x1xi1> to vector<1x16x1xi1>
    %103 = vector.broadcast %102 : vector<1x16x1xi1> to vector<10x16x128xi1>
    %104 = vector.broadcast %cst_22 : f32 to vector<10x16x128xf32>
    %105 = arith.select %103, %101, %104 : vector<10x16x128xi1>, vector<10x16x128xf32>
    %106 = vector.extract_strided_slice %105 {offsets = [0, 0, 0], sizes = [8, 16, 128], strides = [1, 1, 1]} : vector<10x16x128xf32> to vector<8x16x128xf32>
    %107 = vector.extract_strided_slice %35 {offsets = [0, 2, 0], sizes = [1, 1, 128], strides = [1, 1, 1]} : vector<3x3x128xf32> to vector<1x1x128xf32>
    %108 = vector.shape_cast %107 : vector<1x1x128xf32> to vector<128xf32>
    %109 = vector.shape_cast %108 : vector<128xf32> to vector<1x1x128xf32>
    %110 = vector.broadcast %109 : vector<1x1x128xf32> to vector<8x16x128xf32>
    %111 = arith.mulf %106, %110 : vector<8x16x128xf32>
    %112 = arith.addf %100, %111 : vector<8x16x128xf32>
    %113 = vector.extract_strided_slice %105 {offsets = [1, 0, 0], sizes = [8, 16, 128], strides = [1, 1, 1]} : vector<10x16x128xf32> to vector<8x16x128xf32>
    %114 = vector.extract_strided_slice %35 {offsets = [1, 2, 0], sizes = [1, 1, 128], strides = [1, 1, 1]} : vector<3x3x128xf32> to vector<1x1x128xf32>
    %115 = vector.shape_cast %114 : vector<1x1x128xf32> to vector<128xf32>
    %116 = vector.shape_cast %115 : vector<128xf32> to vector<1x1x128xf32>
    %117 = vector.broadcast %116 : vector<1x1x128xf32> to vector<8x16x128xf32>
    %118 = arith.mulf %113, %117 : vector<8x16x128xf32>
    %119 = arith.addf %112, %118 : vector<8x16x128xf32>
    %120 = vector.extract_strided_slice %105 {offsets = [2, 0, 0], sizes = [8, 16, 128], strides = [1, 1, 1]} : vector<10x16x128xf32> to vector<8x16x128xf32>
    %121 = vector.extract_strided_slice %35 {offsets = [2, 2, 0], sizes = [1, 1, 128], strides = [1, 1, 1]} : vector<3x3x128xf32> to vector<1x1x128xf32>
    %122 = vector.shape_cast %121 : vector<1x1x128xf32> to vector<128xf32>
    %123 = vector.shape_cast %122 : vector<128xf32> to vector<1x1x128xf32>
    %124 = vector.broadcast %123 : vector<1x1x128xf32> to vector<8x16x128xf32>
    %125 = arith.mulf %120, %124 : vector<8x16x128xf32>
    %126 = arith.addf %119, %125 : vector<8x16x128xf32>
    %c0_23 = arith.constant 0 : index
    %c0_24 = arith.constant 0 : index
    %127 = vector.load %arg6[%c0_23, %c0_24] : memref<1x128xf32, #tpu.memory_space<vmem>>, vector<1x128xf32>
    %128 = vector.shape_cast %127 : vector<1x128xf32> to vector<1x1x128xf32>
    %129 = vector.broadcast %128 : vector<1x1x128xf32> to vector<8x16x128xf32>
    %130 = arith.addf %126, %129 : vector<8x16x128xf32>
    %131 = arith.negf %130 : vector<8x16x128xf32>
    %132 = math.exp %131 : vector<8x16x128xf32>
    %cst_25 = arith.constant 1.000000e+00 : f32
    %133 = vector.broadcast %cst_25 : f32 to vector<8x16x128xf32>
    %134 = arith.addf %133, %132 : vector<8x16x128xf32>
    %135 = arith.divf %133, %134 : vector<8x16x128xf32>
    %136 = arith.mulf %130, %135 : vector<8x16x128xf32>
    %137 = vector.shape_cast %136 : vector<8x16x128xf32> to vector<128x128xf32>
    %cst_26 = arith.constant dense<0.000000e+00> : vector<128xf32>
    %138 = vector.multi_reduction <add>, %137, %cst_26 [0] : vector<128x128xf32> to vector<128xf32>
    %139 = vector.shape_cast %138 : vector<128xf32> to vector<1x128xf32>
    %c0_27 = arith.constant 0 : index
    %c0_28 = arith.constant 0 : index
    %c0_29 = arith.constant 0 : index
    %c0_30 = arith.constant 0 : index
    %140 = vector.load %arg8[%c0_27, %c0_28, %c0_29, %c0_30] : memref<1x1x1x128xf32, #tpu.memory_space<vmem>>, vector<1x1x1x128xf32>
    %141 = vector.shape_cast %140 : vector<1x1x1x128xf32> to vector<1x128xf32>
    %142 = vector.shape_cast %139 : vector<1x128xf32> to vector<1x1x1x128xf32>
    tpu.vector_store %arg8[%c0_27, %c0_28, %c0_29, %c0_30], %142 {strides = array<i32>} : memref<1x1x1x128xf32, #tpu.memory_space<vmem>>, vector<1x1x1x128xf32>,
    %143 = arith.truncf %136 : vector<8x16x128xf32> to vector<8x16x128xbf16>
    %c0_31 = arith.constant 0 : index
    %c0_32 = arith.constant 0 : index
    %c0_33 = arith.constant 0 : index
    %c0_34 = arith.constant 0 : index
    %144 = vector.load %arg7[%c0_31, %c0_32, %c0_33, %c0_34] : memref<1x8x16x128xbf16, #tpu.memory_space<vmem>>, vector<1x8x16x128xbf16>
    %145 = vector.shape_cast %144 : vector<1x8x16x128xbf16> to vector<8x16x128xbf16>
    %146 = vector.shape_cast %143 : vector<8x16x128xbf16> to vector<1x8x16x128xbf16>
    tpu.vector_store %arg7[%c0_31, %c0_32, %c0_33, %c0_34], %146 {strides = array<i32>} : memref<1x8x16x128xbf16, #tpu.memory_space<vmem>>, vector<1x8x16x128xbf16>,
    return
  }
  func.func @transform_0(%arg0: i32, %arg1: i32) -> (i32, i32, i32, i32) {
    %c0_i32 = arith.constant 0 : i32
    %c0_i32_0 = arith.constant 0 : i32
    %c0_i32_1 = arith.constant 0 : i32
    %c0_i32_2 = arith.constant 0 : i32
    return %arg0, %c0_i32, %c0_i32_0, %c0_i32_1 : i32, i32, i32, i32
  }
  func.func @transform_1(%arg0: i32, %arg1: i32) -> (i32, i32) {
    %c0_i32 = arith.constant 0 : i32
    %c0_i32_0 = arith.constant 0 : i32
    %c0_i32_1 = arith.constant 0 : i32
    return %c0_i32, %c0_i32_0 : i32, i32
  }
  func.func @transform_2(%arg0: i32, %arg1: i32) -> (i32, i32) {
    %c0_i32 = arith.constant 0 : i32
    %c0_i32_0 = arith.constant 0 : i32
    %c0_i32_1 = arith.constant 0 : i32
    return %c0_i32, %c0_i32_0 : i32, i32
  }
  func.func @transform_3(%arg0: i32, %arg1: i32) -> (i32, i32, i32) {
    %c0_i32 = arith.constant 0 : i32
    %c0_i32_0 = arith.constant 0 : i32
    %c0_i32_1 = arith.constant 0 : i32
    %c0_i32_2 = arith.constant 0 : i32
    return %c0_i32, %c0_i32_0, %c0_i32_1 : i32, i32, i32
  }
  func.func @transform_4(%arg0: i32, %arg1: i32) -> (i32, i32) {
    %c0_i32 = arith.constant 0 : i32
    %c0_i32_0 = arith.constant 0 : i32
    %c0_i32_1 = arith.constant 0 : i32
    return %c0_i32, %c0_i32_0 : i32, i32
  }
  func.func @transform_5(%arg0: i32, %arg1: i32) -> (i32, i32, i32, i32) {
    %c0_i32 = arith.constant 0 : i32
    %c0_i32_0 = arith.constant 0 : i32
    %c0_i32_1 = arith.constant 0 : i32
    return %arg0, %arg1, %c0_i32, %c0_i32_0 : i32, i32, i32, i32
  }
  func.func @transform_6(%arg0: i32, %arg1: i32) -> (i32, i32, i32, i32) {
    %c0_i32 = arith.constant 0 : i32
    %c0_i32_0 = arith.constant 0 : i32
    %c0_i32_1 = arith.constant 0 : i32
    return %arg0, %arg1, %c0_i32, %c0_i32_0 : i32, i32, i32, i32
  }
}

</mosaic_0001>

<llo_original>
// kernel: tpu_custom_call.1
$region0: #{tpu_custom_call.1}
  #allocation0 [shape = 'u32[]', space=smem, size = 0x4, offset = 0x4, fixed_abs, tag = 'smem constant byte address 0x4 - core index']
  #allocation1 [shape = 'u32[144,128]{1,0:T(1,128)}', space=vmem, size = 0x12000, scoped, tag = 'internal scratch']
  %s0 = inlined_call_operand.vmem [shape: f32[2,18,16,4], index: 0, kind: input, shape index: {}]
  %s1 = inlined_call_operand.vmem [shape: bf16[4,128], index: 1, kind: input, shape index: {}]
  %s2 = inlined_call_operand.vmem [shape: f32[1,128], index: 2, kind: input, shape index: {}]
  %s3 = inlined_call_operand.vmem [shape: f32[3,3,128], index: 3, kind: input, shape index: {}]
  %s4 = inlined_call_operand.vmem [shape: f32[1,128], index: 4, kind: input, shape index: {}]
  %s5 = inlined_call_operand.hbm [shape: bf16[2,16,16,128], index: 5, kind: output, shape index: {0}]
  %s6 = inlined_call_operand.hbm [shape: f32[2,2,1,128], index: 6, kind: output, shape index: {1}]
  %7 = xla_tuple %s5, %s6
  %s8 = sld [smem:[#allocation0]]
  $region61: #{tpu_custom_call.1} parent=0
    _
  %s10 = ssub.s32 1, %s8
  %s11 = scalar_select 0, %s10, %s8
  $region1: #{tpu_custom_call.1} parent=0
    #allocation2 [shape = 'u8[65536]{0}', space=vmem, size = 0x10000, scoped, tag = 'output window, operand 0']
    #allocation3 [shape = 's32[2]{0}', space=sflag, size = 0x8, scoped, tag = 'scoped memory for tpu_custom_call.1']
    #allocation4 [shape = 'u8[1024]{0}', space=vmem, size = 0x400, scoped, tag = 'output window, operand 1']
    #allocation5 [shape = 's32[2]{0}', space=sflag, size = 0x8, scoped, tag = 'scoped memory for tpu_custom_call.1']
    %12 = vsyncpa [#allocation3], 0
    %s13 = scalar_lea.sflag [#allocation3], 1
    %14 = vsyncpa %s13, 0
    %15 = vsyncpa [#allocation5], 0
    %s16 = scalar_lea.sflag [#allocation5], 1
    %17 = vsyncpa %s16, 0
    loop: start=0, step=1, limit=6
    $region2: #{tpu_custom_call.1} parent=1 // loop_pre_header
      _
    $region3: #{tpu_custom_call.1} parent=1 // loop_header
      %s19 = sphi 0, %s23
      %p20 = scmp.ge.s32.totalorder %s19, 6
      %s26 = sphi 0, %s38
      %s27 = sphi 0, %s34
      %s28 = sphi 0, %s26
      %s29 = sphi 0, %s27
      %s30 = sphi 0, %s28
      %s31 = sphi 0, %s29
      %s41 = sphi 0, %s43
      %s44 = sphi 0, %s41
      %s45 = sphi 0, %s44
      %s61 = sphi 0, %s45
      %s65 = sphi 0, %s65
      %s67 = sphi 0, %s65
      %s68 = sphi 0, %s67
      %s82 = sphi 0, %s68
      %s86 = sphi 0, %s86
      %s88 = sphi 0, %s86
      %s89 = sphi 0, %s88
      %s103 = sphi 0, %s89
      %s107 = sphi 0, %s107
      %s109 = sphi 0, %s107
      %s110 = sphi 0, %s109
      %s124 = sphi 0, %s110
      %s128 = sphi 0, %s128
      %s130 = sphi 0, %s128
      %s131 = sphi 0, %s130
      %s145 = sphi 0, %s131
      %s153 = sphi 0, %s155
      %s156 = sphi 0, %s153
      %s157 = sphi 0, %s156
      %s173 = sphi 0, %s157
      %s181 = sphi 0, %s183
      %s184 = sphi 0, %s181
      %s185 = sphi 0, %s184
      %s201 = sphi 0, %s185
    $region4: #{tpu_custom_call.1} parent=1 // loop_header_branch
      %22 = sbr.rel (%p20) target = $region8
    $region5: #{tpu_custom_call.1} parent=1 // loop_body
      %s24 = ssub.s32 %s19, 1
      %s25 = ssub.s32 %s19, 2
      %s32 = sadd.s32 1, %s27
      %p33 = scmp.ge.s32.totalorder %s32, 2
      %s34 = scalar_select %p33, 0, %s32
      %s35 = sadd.s32 1, %s26
      %s36 = scalar_select %p33, %s35, %s26
      %p37 = scmp.ge.s32.totalorder %s36, 2
      %s38 = scalar_select %p37, 0, %s36
      %s39 = ssub.s32 %s26, %s38
      %p40 = scmp.eq.s32.totalorder %s39, 0
      %s42 = sadd.s32 %s41, 1
      %s43 = scalar_select %p40, %s41, %s42
      %p46 = pneg %p40
      %p47 = scmp.eq.s32.totalorder %s19, 3
      %p48 = por %p46, %p47
      %p49 = scmp.ne.s32.totalorder %s41, %s44
      %p50 = scmp.eq.s32.totalorder %s19, 0
      %p51 = por %p49, %p50
      %p52 = scmp.ne.s32.totalorder %s41, %s44
      %p53 = scmp.eq.s32.totalorder %s24, 3
      %p54 = por %p52, %p53
      %p55 = scmp.ne.s32.totalorder %s44, %s45
      %p56 = scmp.eq.s32.totalorder %s24, 0
      %p57 = por %p55, %p56
      %p58 = scmp.ne.s32.totalorder %s44, %s45
      %p59 = scmp.eq.s32.totalorder %s25, 3
      %p60 = por %p58, %p59
      %p62 = scmp.ne.s32.totalorder %s45, %s61
      %p63 = scmp.eq.s32.totalorder %s25, 0
      %p64 = por %p62, %p63
      %s66 = sadd.s32 %s65, 1
      %p69 = scmp.eq.s32.totalorder %s19, 3
      %p70 = scmp.ne.s32.totalorder %s65, %s67
      %p71 = scmp.eq.s32.totalorder %s19, 0
      %p72 = por %p70, %p71
      %p73 = scmp.ne.s32.totalorder %s65, %s67
      %p74 = scmp.eq.s32.totalorder %s24, 3
      %p75 = por %p73, %p74
      %p76 = scmp.ne.s32.totalorder %s67, %s68
      %p77 = scmp.eq.s32.totalorder %s24, 0
      %p78 = por %p76, %p77
      %p79 = scmp.ne.s32.totalorder %s67, %s68
      %p80 = scmp.eq.s32.totalorder %s25, 3
      %p81 = por %p79, %p80
      %p83 = scmp.ne.s32.totalorder %s68, %s82
      %p84 = scmp.eq.s32.totalorder %s25, 0
      %p85 = por %p83, %p84
      %s87 = sadd.s32 %s86, 1
      %p90 = scmp.eq.s32.totalorder %s19, 3
      %p91 = scmp.ne.s32.totalorder %s86, %s88
      %p92 = scmp.eq.s32.totalorder %s19, 0
      %p93 = por %p91, %p92
      %p94 = scmp.ne.s32.totalorder %s86, %s88
      %p95 = scmp.eq.s32.totalorder %s24, 3
      %p96 = por %p94, %p95
      %p97 = scmp.ne.s32.totalorder %s88, %s89
      %p98 = scmp.eq.s32.totalorder %s24, 0
      %p99 = por %p97, %p98
      %p100 = scmp.ne.s32.totalorder %s88, %s89
      %p101 = scmp.eq.s32.totalorder %s25, 3
      %p102 = por %p100, %p101
      %p104 = scmp.ne.s32.totalorder %s89, %s103
      %p105 = scmp.eq.s32.totalorder %s25, 0
      %p106 = por %p104, %p105
      %s108 = sadd.s32 %s107, 1
      %p111 = scmp.eq.s32.totalorder %s19, 3
      %p112 = scmp.ne.s32.totalorder %s107, %s109
      %p113 = scmp.eq.s32.totalorder %s19, 0
      %p114 = por %p112, %p113
      %p115 = scmp.ne.s32.totalorder %s107, %s109
      %p116 = scmp.eq.s32.totalorder %s24, 3
      %p117 = por %p115, %p116
      %p118 = scmp.ne.s32.totalorder %s109, %s110
      %p119 = scmp.eq.s32.totalorder %s24, 0
      %p120 = por %p118, %p119
      %p121 = scmp.ne.s32.totalorder %s109, %s110
      %p122 = scmp.eq.s32.totalorder %s25, 3
      %p123 = por %p121, %p122
      %p125 = scmp.ne.s32.totalorder %s110, %s124
      %p126 = scmp.eq.s32.totalorder %s25, 0
      %p127 = por %p125, %p126
      %s129 = sadd.s32 %s128, 1
      %p132 = scmp.eq.s32.totalorder %s19, 3
      %p133 = scmp.ne.s32.totalorder %s128, %s130
      %p134 = scmp.eq.s32.totalorder %s19, 0
      %p135 = por %p133, %p134
      %p136 = scmp.ne.s32.totalorder %s128, %s130
      %p137 = scmp.eq.s32.totalorder %s24, 3
      %p138 = por %p136, %p137
      %p139 = scmp.ne.s32.totalorder %s130, %s131
      %p140 = scmp.eq.s32.totalorder %s24, 0
      %p141 = por %p139, %p140
      %p142 = scmp.ne.s32.totalorder %s130, %s131
      %p143 = scmp.eq.s32.totalorder %s25, 3
      %p144 = por %p142, %p143
      %p146 = scmp.ne.s32.totalorder %s131, %s145
      %p147 = scmp.eq.s32.totalorder %s25, 0
      %p148 = por %p146, %p147
      %s149 = ssub.s32 %s26, %s38
      %s150 = ssub.s32 %s27, %s34
      %s151 = sor.u32 %s149, %s150
      %p152 = scmp.eq.s32.totalorder %s151, 0
      %s154 = sadd.s32 %s153, 1
      %s155 = scalar_select %p152, %s153, %s154
      %p158 = pneg %p152
      %p159 = scmp.eq.s32.totalorder %s19, 3
      %p160 = por %p158, %p159
      %p161 = scmp.ne.s32.totalorder %s153, %s156
      %p162 = scmp.eq.s32.totalorder %s19, 0
      %p163 = por %p161, %p162
      %p164 = scmp.ne.s32.totalorder %s153, %s156
      %p165 = scmp.eq.s32.totalorder %s24, 3
      %p166 = por %p164, %p165
      %p167 = scmp.ne.s32.totalorder %s156, %s157
      %p168 = scmp.eq.s32.totalorder %s24, 0
      %p169 = por %p167, %p168
      %p170 = scmp.ne.s32.totalorder %s156, %s157
      %p171 = scmp.eq.s32.totalorder %s25, 3
      %p172 = por %p170, %p171
      %p174 = scmp.ne.s32.totalorder %s157, %s173
      %p175 = scmp.eq.s32.totalorder %s25, 0
      %p176 = por %p174, %p175
      %s177 = ssub.s32 %s26, %s38
      %s178 = ssub.s32 %s27, %s34
      %s179 = sor.u32 %s177, %s178
      %p180 = scmp.eq.s32.totalorder %s179, 0
      %s182 = sadd.s32 %s181, 1
      %s183 = scalar_select %p180, %s181, %s182
      %p186 = pneg %p180
      %p187 = scmp.eq.s32.totalorder %s19, 3
      %p188 = por %p186, %p187
      %p189 = scmp.ne.s32.totalorder %s181, %s184
      %p190 = scmp.eq.s32.totalorder %s19, 0
      %p191 = por %p189, %p190
      %p192 = scmp.ne.s32.totalorder %s181, %s184
      %p193 = scmp.eq.s32.totalorder %s24, 3
      %p194 = por %p192, %p193
      %p195 = scmp.ne.s32.totalorder %s184, %s185
      %p196 = scmp.eq.s32.totalorder %s24, 0
      %p197 = por %p195, %p196
      %p198 = scmp.ne.s32.totalorder %s184, %s185
      %p199 = scmp.eq.s32.totalorder %s25, 3
      %p200 = por %p198, %p199
      %p202 = scmp.ne.s32.totalorder %s185, %s201
      %p203 = scmp.eq.s32.totalorder %s25, 0
      %p204 = por %p202, %p203
      %p205 = scmp.le.s32.totalorder 1, %s19
      %p206 = scmp.lt.s32.totalorder %s19, 5
      %p207 = pnand %p205, %p206
      %p208 = pneg %p207
      // Predicated region
      $region9: #{tpu_custom_call.1} parent=5 // pred_check
        _
      $region10: #{tpu_custom_call.1} parent=5 // pred_check_branch
        %210 = sbr.rel (%p207) target = $region12
      $region11: #{tpu_custom_call.1} parent=5 // pred_region
        %s211 = ssub.s32 %s19, 1
        // Predicated region
        $region13: #{tpu_custom_call.1} parent=11 // pred_check
          %p212 = pneg %p78
        $region14: #{tpu_custom_call.1} parent=11 // pred_check_branch
          %214 = sbr.rel (%p212) target = $region16
        $region15: #{tpu_custom_call.1} parent=11 // pred_region
          _
        $region16: #{tpu_custom_call.1} parent=11 // pred_fallthru
          _
        // Predicated region
        $region17: #{tpu_custom_call.1} parent=11 // pred_check
          %p215 = pneg %p99
        $region18: #{tpu_custom_call.1} parent=11 // pred_check_branch
          %217 = sbr.rel (%p215) target = $region20
        $region19: #{tpu_custom_call.1} parent=11 // pred_region
          _
        $region20: #{tpu_custom_call.1} parent=11 // pred_fallthru
          _
        // Predicated region
        $region21: #{tpu_custom_call.1} parent=11 // pred_check
          %p218 = pneg %p120
        $region22: #{tpu_custom_call.1} parent=11 // pred_check_branch
          %220 = sbr.rel (%p218) target = $region24
        $region23: #{tpu_custom_call.1} parent=11 // pred_region
          _
        $region24: #{tpu_custom_call.1} parent=11 // pred_fallthru
          _
        // Predicated region
        $region25: #{tpu_custom_call.1} parent=11 // pred_check
          %p221 = pneg %p141
        $region26: #{tpu_custom_call.1} parent=11 // pred_check_branch
          %223 = sbr.rel (%p221) target = $region28
        $region27: #{tpu_custom_call.1} parent=11 // pred_region
          _
        $region28: #{tpu_custom_call.1} parent=11 // pred_fallthru
          _
      $region12: #{tpu_custom_call.1} parent=5 // pred_fallthru
        _
      %p224 = scmp.lt.s32.totalorder %s19, 4
      // Predicated region
      $region29: #{tpu_custom_call.1} parent=5 // pred_check
        %p225 = pneg %p224
      $region30: #{tpu_custom_call.1} parent=5 // pred_check_branch
        %227 = sbr.rel (%p225) target = $region32
      $region31: #{tpu_custom_call.1} parent=5 // pred_region
        // Predicated region
        $region33: #{tpu_custom_call.1} parent=31 // pred_check
          %p228 = pneg %p51
        $region34: #{tpu_custom_call.1} parent=31 // pred_check_branch
          %230 = sbr.rel (%p228) target = $region36
        $region35: #{tpu_custom_call.1} parent=31 // pred_region
          %p231 = scmp.lt.s32.totalorder %s26, 1
          %s232 = scalar_select %p231, %s26, 1
          %s233 = smul.addr %s232, 36
          %s234 = smul.addr %s233, 8
          %s235 = scalar_lea.vmem %s0, %s234
        $region36: #{tpu_custom_call.1} parent=31 // pred_fallthru
          _
      $region32: #{tpu_custom_call.1} parent=5 // pred_fallthru
        _
      %p236 = scmp.le.s32.totalorder 1, %s19
      %p237 = scmp.lt.s32.totalorder %s19, 5
      %p238 = pnand %p236, %p237
      %p239 = pneg %p238
      // Predicated region
      $region37: #{tpu_custom_call.1} parent=5 // pred_check
        _
      $region38: #{tpu_custom_call.1} parent=5 // pred_check_branch
        %241 = sbr.rel (%p238) target = $region40
      $region39: #{tpu_custom_call.1} parent=5 // pred_region
        %s242 = ssub.s32 %s19, 1
        %p243 = scmp.lt.s32.totalorder %s28, 1
        %s244 = scalar_select %p243, %s28, 1
        %s245 = smul.addr %s244, 36
        %s246 = smul.addr %s245, 8
        %s247 = scalar_lea.vmem %s0, %s246
        %p248 = pneg %p57
        %p249 = pneg %p54
        %p250 = pneg %p78
        %p251 = pneg %p75
        %p252 = pneg %p99
        %p253 = pneg %p96
        %p254 = pneg %p120
        %p255 = pneg %p117
        %p256 = pneg %p141
        %p257 = pneg %p138
        %p258 = pneg %p169
        %p259 = pneg %p166
        %s260 = sand.u32 %s156, 1
        %s261 = scalar_lea.sflag [#allocation3], %s260
        %s262 = sand.u32 %s156, 1
        %s263 = smul.addr %s262, 64
        %s264 = scalar_lea.vmem [#allocation2], %s263
        %p265 = pneg %p197
        %p266 = pneg %p194
        %s267 = sand.u32 %s184, 1
        %s268 = scalar_lea.sflag [#allocation5], %s267
        %s269 = sand.u32 %s184, 1
        %s270 = scalar_lea.vmem [#allocation4], %s269
        %p271 = scmp.lt.s32.totalorder %s28, 1
        %s272 = scalar_select %p271, %s28, 1
        %s273 = smul.addr %s272, 36
        %s274 = smul.addr %s273, 8
        %s275 = scalar_lea.vmem %s0, %s274
        %s276 = smul.u32 8, %s29
        %s278 = smul.u32 %s29, 8
        %s279 = smul.u32 %s278, 16
        %s280 = scalar_lea.vmem %s275, %s279
        %v281 = vld [vmem:[%s280] sm:$0xff]
        %v282 = vld [vmem:[%s280 + $0x8] sm:$0xff]
        %v283 = vld [vmem:[%s280 + $0x10] sm:$0xff]
        %v284 = vld [vmem:[%s280 + $0x18] sm:$0xff]
        %v285 = vld [vmem:[%s280 + $0x20] sm:$0xff]
        %v286 = vld [vmem:[%s280 + $0x28] sm:$0xff]
        %v287 = vld [vmem:[%s280 + $0x30] sm:$0xff]
        %v288 = vld [vmem:[%s280 + $0x38] sm:$0xff]
        %v289 = vld [vmem:[%s280 + $0x40] sm:$0xff]
        %v290 = vld [vmem:[%s280 + $0x48] sm:$0xff]
        %v291 = vld [vmem:[%s280 + $0x50] sm:$0xff]
        %v292 = vld [vmem:[%s280 + $0x58] sm:$0xff]
        %v293 = vld [vmem:[%s280 + $0x60] sm:$0xff]
        %v294 = vld [vmem:[%s280 + $0x68] sm:$0xff]
        %v295 = vld [vmem:[%s280 + $0x70] sm:$0xff]
        %v296 = vld [vmem:[%s280 + $0x78] sm:$0xff]
        %v297 = vld [vmem:[%s280 + $0x80] sm:$0xff]
        %v298 = vld [vmem:[%s280 + $0x88] sm:$0xff]
        %v299 = vld [vmem:[%s280 + $0x90] sm:$0xff]
        %v300 = vld [vmem:[%s280 + $0x98] sm:$0xff]
        %v301 = vpack.c.bf16 %v282, %v281
        %v302 = vpack.c.bf16 %v284, %v283
        %v303 = vpack.c.bf16 %v286, %v285
        %v304 = vpack.c.bf16 %v288, %v287
        %v305 = vpack.c.bf16 %v290, %v289
        %v306 = vpack.c.bf16 %v292, %v291
        %v307 = vpack.c.bf16 %v294, %v293
        %v308 = vpack.c.bf16 %v296, %v295
        %v309 = vpack.c.bf16 %v298, %v297
        %v310 = vpack.c.bf16 %v300, %v299
        %v311 = vld [vmem:[%s1] sm:$0x3]
        %v312 = vld [vmem:[%s2] sm:$0x1]
        %v314 = vlaneseq
        %v315 = vshrl.u32 %v314, 7
        %v316 = vsub.s32 0, %v315
        %v317 = vrot.slane %v312, %v316
        %vm319 = vcmask 31744
        %v321 = vsel %vm319, %v301, 0
        %v324 = vsel %vm319, %v302, 0
        %v327 = vsel %vm319, %v303, 0
        %v330 = vsel %vm319, %v304, 0
        %v333 = vsel %vm319, %v305, 0
        %v336 = vsel %vm319, %v306, 0
        %v339 = vsel %vm319, %v307, 0
        %v342 = vsel %vm319, %v308, 0
        %v345 = vsel %vm319, %v309, 0
        %v348 = vsel %vm319, %v310, 0
        %vm350 = vcmask 1041408
        %v352 = vsel %vm350, %v311, 0
        %354 = vmatprep.subr.bf16.mxu0 0
        %355 = vmatpush1.bf16.msra.mxu0 0
        %356 = vmatprep.subr.bf16.mxu0 0
        %357 = vmatpush1.bf16.msra.mxu0 0
        %358 = vmatprep.subr.bf16.mxu0 0
        %359 = vmatpush1.bf16.msra.mxu0 0
        %360 = vmatprep.subr.bf16.mxu0 0
        %361 = vmatpush1.bf16.msra.mxu0 0
        %362 = vmatprep.subr.bf16.mxu0 0
        %363 = vmatpush1.bf16.msra.mxu0 0
        %364 = vmatprep.subr.bf16.mxu0 0
        %365 = vmatpush1.bf16.msra.mxu0 0
        %366 = vmatprep.subr.bf16.mxu0 0
        %367 = vmatpush1.bf16.msra.mxu0 0
        %368 = vmatprep.subr.bf16.mxu0 0
        %369 = vmatpush1.bf16.msra.mxu0 %v352
        %370 = vmatprep.subr.bf16.mxu0 0
        %371 = vmatpush2.bf16.msra.mxu0 0
        %372 = vmatprep.subr.bf16.mxu0 0
        %373 = vmatpush2.bf16.msra.mxu0 0
        %374 = vmatprep.subr.bf16.mxu0 0
        %375 = vmatpush2.bf16.msra.mxu0 0
        %376 = vmatprep.subr.bf16.mxu0 0
        %377 = vmatpush2.bf16.msra.mxu0 0
        %378 = vmatprep.subr.bf16.mxu0 0
        %379 = vmatpush2.bf16.msra.mxu0 0
        %380 = vmatprep.subr.bf16.mxu0 0
        %381 = vmatpush2.bf16.msra.mxu0 0
        %382 = vmatprep.subr.bf16.mxu0 0
        %383 = vmatpush2.bf16.msra.mxu0 0
        %384 = vmatprep.subr.bf16.mxu0 0
        %385 = vmatpush2.bf16.msra.mxu0 0
        %386 = vmatprep.mubr.bf16.mxu0 0
        %387 = vmatmul.mubr.bf16.gmra.mxu0 %v321
        %v388 = vpop.f32.mrf.mxu0
        %v389 = vadd.f32 %v317, %v388
        %v390 = vpop.f32.mrf.mxu0
        %v391 = vpop.f32.mrf.mxu0
        %v392 = vadd.f32 %v317, %v391
        %v393 = vpop.f32.mrf.mxu0
        %394 = vmatprep.mubr.bf16.mxu0 0
        %395 = vmatmul.mubr.bf16.gmra.mxu0 %v324
        %v396 = vpop.f32.mrf.mxu0
        %v397 = vadd.f32 %v317, %v396
        %v398 = vpop.f32.mrf.mxu0
        %v399 = vpop.f32.mrf.mxu0
        %v400 = vadd.f32 %v317, %v399
        %v401 = vpop.f32.mrf.mxu0
        %402 = vmatprep.mubr.bf16.mxu0 0
        %403 = vmatmul.mubr.bf16.gmra.mxu0 %v327
        %v404 = vpop.f32.mrf.mxu0
        %v405 = vadd.f32 %v317, %v404
        %v406 = vpop.f32.mrf.mxu0
        %v407 = vpop.f32.mrf.mxu0
        %v408 = vadd.f32 %v317, %v407
        %v409 = vpop.f32.mrf.mxu0
        %410 = vmatprep.mubr.bf16.mxu0 0
        %411 = vmatmul.mubr.bf16.gmra.mxu0 %v330
        %v412 = vpop.f32.mrf.mxu0
        %v413 = vadd.f32 %v317, %v412
        %v414 = vpop.f32.mrf.mxu0
        %v415 = vpop.f32.mrf.mxu0
        %v416 = vadd.f32 %v317, %v415
        %v417 = vpop.f32.mrf.mxu0
        %418 = vmatprep.mubr.bf16.mxu0 0
        %419 = vmatmul.mubr.bf16.gmra.mxu0 %v333
        %v420 = vpop.f32.mrf.mxu0
        %v421 = vadd.f32 %v317, %v420
        %v422 = vpop.f32.mrf.mxu0
        %v423 = vpop.f32.mrf.mxu0
        %v424 = vadd.f32 %v317, %v423
        %v425 = vpop.f32.mrf.mxu0
        %426 = vmatprep.mubr.bf16.mxu0 0
        %427 = vmatmul.mubr.bf16.gmra.mxu0 %v336
        %v428 = vpop.f32.mrf.mxu0
        %v429 = vadd.f32 %v317, %v428
        %v430 = vpop.f32.mrf.mxu0
        %v431 = vpop.f32.mrf.mxu0
        %v432 = vadd.f32 %v317, %v431
        %v433 = vpop.f32.mrf.mxu0
        %434 = vmatprep.mubr.bf16.mxu0 0
        %435 = vmatmul.mubr.bf16.gmra.mxu0 %v339
        %v436 = vpop.f32.mrf.mxu0
        %v437 = vadd.f32 %v317, %v436
        %v438 = vpop.f32.mrf.mxu0
        %v439 = vpop.f32.mrf.mxu0
        %v440 = vadd.f32 %v317, %v439
        %v441 = vpop.f32.mrf.mxu0
        %442 = vmatprep.mubr.bf16.mxu0 0
        %443 = vmatmul.mubr.bf16.gmra.mxu0 %v342
        %v444 = vpop.f32.mrf.mxu0
        %v445 = vadd.f32 %v317, %v444
        %v446 = vpop.f32.mrf.mxu0
        %v447 = vpop.f32.mrf.mxu0
        %v448 = vadd.f32 %v317, %v447
        %v449 = vpop.f32.mrf.mxu0
        %450 = vmatprep.mubr.bf16.mxu0 0
        %451 = vmatmul.mubr.bf16.gmra.mxu0 %v345
        %v452 = vpop.f32.mrf.mxu0
        %v453 = vadd.f32 %v317, %v452
        %v454 = vpop.f32.mrf.mxu0
        %v455 = vpop.f32.mrf.mxu0
        %v456 = vadd.f32 %v317, %v455
        %v457 = vpop.f32.mrf.mxu0
        %458 = vmatprep.mubr.bf16.mxu0 0
        %459 = vmatmul.mubr.bf16.gmra.mxu0 %v348
        %v460 = vpop.f32.mrf.mxu0
        %v461 = vadd.f32 %v317, %v460
        %v462 = vpop.f32.mrf.mxu0
        %v463 = vpop.f32.mrf.mxu0
        %v464 = vadd.f32 %v317, %v463
        %v465 = vpop.f32.mrf.mxu0
        %466 = vdwg.mxu0
        %v467 = vxor.u32 %v389, 2147483648
        %v468 = vxor.u32 %v392, 2147483648
        %v469 = vxor.u32 %v397, 2147483648
        %v470 = vxor.u32 %v400, 2147483648
        %v471 = vxor.u32 %v405, 2147483648
        %v472 = vxor.u32 %v408, 2147483648
        %v473 = vxor.u32 %v413, 2147483648
        %v474 = vxor.u32 %v416, 2147483648
        %v475 = vxor.u32 %v421, 2147483648
        %v476 = vxor.u32 %v424, 2147483648
        %v477 = vxor.u32 %v429, 2147483648
        %v478 = vxor.u32 %v432, 2147483648
        %v479 = vxor.u32 %v437, 2147483648
        %v480 = vxor.u32 %v440, 2147483648
        %v481 = vxor.u32 %v445, 2147483648
        %v482 = vxor.u32 %v448, 2147483648
        %v483 = vxor.u32 %v453, 2147483648
        %v484 = vxor.u32 %v456, 2147483648
        %v485 = vxor.u32 %v461, 2147483648
        %v486 = vxor.u32 %v464, 2147483648
        %v487 = vmul.f32 %v467, 1.442695
        %v488 = vpow.pop %v487
        %v489 = vmul.f32 %v468, 1.442695
        %v490 = vpow.pop %v489
        %v491 = vmul.f32 %v469, 1.442695
        %v492 = vpow.pop %v491
        %v493 = vmul.f32 %v470, 1.442695
        %v494 = vpow.pop %v493
        %v495 = vmul.f32 %v471, 1.442695
        %v496 = vpow.pop %v495
        %v497 = vmul.f32 %v472, 1.442695
        %v498 = vpow.pop %v497
        %v499 = vmul.f32 %v473, 1.442695
        %v500 = vpow.pop %v499
        %v501 = vmul.f32 %v474, 1.442695
        %v502 = vpow.pop %v501
        %v503 = vmul.f32 %v475, 1.442695
        %v504 = vpow.pop %v503
        %v505 = vmul.f32 %v476, 1.442695
        %v506 = vpow.pop %v505
        %v507 = vmul.f32 %v477, 1.442695
        %v508 = vpow.pop %v507
        %v509 = vmul.f32 %v478, 1.442695
        %v510 = vpow.pop %v509
        %v511 = vmul.f32 %v479, 1.442695
        %v512 = vpow.pop %v511
        %v513 = vmul.f32 %v480, 1.442695
        %v514 = vpow.pop %v513
        %v515 = vmul.f32 %v481, 1.442695
        %v516 = vpow.pop %v515
        %v517 = vmul.f32 %v482, 1.442695
        %v518 = vpow.pop %v517
        %v519 = vmul.f32 %v483, 1.442695
        %v520 = vpow.pop %v519
        %v521 = vmul.f32 %v484, 1.442695
        %v522 = vpow.pop %v521
        %v523 = vmul.f32 %v485, 1.442695
        %v524 = vpow.pop %v523
        %v525 = vmul.f32 %v486, 1.442695
        %v526 = vpow.pop %v525
        %v527 = vadd.f32 %v488, 1.0
        %v528 = vadd.f32 %v490, 1.0
        %v529 = vadd.f32 %v492, 1.0
        %v530 = vadd.f32 %v494, 1.0
        %v531 = vadd.f32 %v496, 1.0
        %v532 = vadd.f32 %v498, 1.0
        %v533 = vadd.f32 %v500, 1.0
        %v534 = vadd.f32 %v502, 1.0
        %v535 = vadd.f32 %v504, 1.0
        %v536 = vadd.f32 %v506, 1.0
        %v537 = vadd.f32 %v508, 1.0
        %v538 = vadd.f32 %v510, 1.0
        %v539 = vadd.f32 %v512, 1.0
        %v540 = vadd.f32 %v514, 1.0
        %v541 = vadd.f32 %v516, 1.0
        %v542 = vadd.f32 %v518, 1.0
        %v543 = vadd.f32 %v520, 1.0
        %v544 = vadd.f32 %v522, 1.0
        %v545 = vadd.f32 %v524, 1.0
        %v546 = vadd.f32 %v526, 1.0
        %v547 = vrcp.pop %v527
        %v548 = vmul.f32 1.0, %v547
        %v549 = vrcp.pop %v528
        %v550 = vmul.f32 1.0, %v549
        %v551 = vrcp.pop %v529
        %v552 = vmul.f32 1.0, %v551
        %v553 = vrcp.pop %v530
        %v554 = vmul.f32 1.0, %v553
        %v555 = vrcp.pop %v531
        %v556 = vmul.f32 1.0, %v555
        %v557 = vrcp.pop %v532
        %v558 = vmul.f32 1.0, %v557
        %v559 = vrcp.pop %v533
        %v560 = vmul.f32 1.0, %v559
        %v561 = vrcp.pop %v534
        %v562 = vmul.f32 1.0, %v561
        %v563 = vrcp.pop %v535
        %v564 = vmul.f32 1.0, %v563
        %v565 = vrcp.pop %v536
        %v566 = vmul.f32 1.0, %v565
        %v567 = vrcp.pop %v537
        %v568 = vmul.f32 1.0, %v567
        %v569 = vrcp.pop %v538
        %v570 = vmul.f32 1.0, %v569
        %v571 = vrcp.pop %v539
        %v572 = vmul.f32 1.0, %v571
        %v573 = vrcp.pop %v540
        %v574 = vmul.f32 1.0, %v573
        %v575 = vrcp.pop %v541
        %v576 = vmul.f32 1.0, %v575
        %v577 = vrcp.pop %v542
        %v578 = vmul.f32 1.0, %v577
        %v579 = vrcp.pop %v543
        %v580 = vmul.f32 1.0, %v579
        %v581 = vrcp.pop %v544
        %v582 = vmul.f32 1.0, %v581
        %v583 = vrcp.pop %v545
        %v584 = vmul.f32 1.0, %v583
        %v585 = vrcp.pop %v546
        %v586 = vmul.f32 1.0, %v585
        %v587 = vmul.f32 %v389, %v548
        %v588 = vmul.f32 %v392, %v550
        %v589 = vmul.f32 %v397, %v552
        %v590 = vmul.f32 %v400, %v554
        %v591 = vmul.f32 %v405, %v556
        %v592 = vmul.f32 %v408, %v558
        %v593 = vmul.f32 %v413, %v560
        %v594 = vmul.f32 %v416, %v562
        %v595 = vmul.f32 %v421, %v564
        %v596 = vmul.f32 %v424, %v566
        %v597 = vmul.f32 %v429, %v568
        %v598 = vmul.f32 %v432, %v570
        %v599 = vmul.f32 %v437, %v572
        %v600 = vmul.f32 %v440, %v574
        %v601 = vmul.f32 %v445, %v576
        %v602 = vmul.f32 %v448, %v578
        %v603 = vmul.f32 %v453, %v580
        %v604 = vmul.f32 %v456, %v582
        %v605 = vmul.f32 %v461, %v584
        %v606 = vmul.f32 %v464, %v586
        %v607 = vlaneseq
        %v608 = vshrl.u32 %v607, 7
        %v609 = vadd.s32 %v608, 8
        %v610 = vadd.s32 %v608, 16
        %v611 = vadd.s32 %v608, 24
        %v612 = vadd.s32 %v608, 32
        %v613 = vadd.s32 %v608, 40
        %v614 = vadd.s32 %v608, 48
        %v615 = vadd.s32 %v608, 56
        %v616 = vadd.s32 %v608, 64
        %v617 = vadd.s32 %v608, 72
        %v618 = vadd.s32 %v608, 80
        %v619 = vadd.s32 %v608, 88
        %v620 = vadd.s32 %v608, 96
        %v621 = vadd.s32 %v608, 104
        %v622 = vadd.s32 %v608, 112
        %v623 = vadd.s32 %v608, 120
        %v624 = vadd.s32 %v608, 128
        %v625 = vadd.s32 %v608, 136
        %v626 = vadd.s32 %v608, 144
        %v627 = vadd.s32 %v608, 152
        %s628 = ssub.s32 1, %s278
        %s629 = smul.u32 %s628, 16
        %s630 = ssub.s32 17, %s278
        %s631 = smul.u32 %s630, 16
        %v632 = vstv %s629
        %vm633 = vcmp.ge.s32.totalorder %v608, %v632
        %vm634 = vcmp.ge.s32.totalorder %v609, %v632
        %vm635 = vcmp.ge.s32.totalorder %v610, %v632
        %vm636 = vcmp.ge.s32.totalorder %v611, %v632
        %vm637 = vcmp.ge.s32.totalorder %v612, %v632
        %vm638 = vcmp.ge.s32.totalorder %v613, %v632
        %vm639 = vcmp.ge.s32.totalorder %v614, %v632
        %vm640 = vcmp.ge.s32.totalorder %v615, %v632
        %vm641 = vcmp.ge.s32.totalorder %v616, %v632
        %vm642 = vcmp.ge.s32.totalorder %v617, %v632
        %vm643 = vcmp.ge.s32.totalorder %v618, %v632
        %vm644 = vcmp.ge.s32.totalorder %v619, %v632
        %vm645 = vcmp.ge.s32.totalorder %v620, %v632
        %vm646 = vcmp.ge.s32.totalorder %v621, %v632
        %vm647 = vcmp.ge.s32.totalorder %v622, %v632
        %vm648 = vcmp.ge.s32.totalorder %v623, %v632
        %vm649 = vcmp.ge.s32.totalorder %v624, %v632
        %vm650 = vcmp.ge.s32.totalorder %v625, %v632
        %vm651 = vcmp.ge.s32.totalorder %v626, %v632
        %vm652 = vcmp.ge.s32.totalorder %v627, %v632
        %v653 = vstv %s631
        %vm654 = vcmp.lt.s32.totalorder %v608, %v653
        %vm655 = vcmp.lt.s32.totalorder %v609, %v653
        %vm656 = vcmp.lt.s32.totalorder %v610, %v653
        %vm657 = vcmp.lt.s32.totalorder %v611, %v653
        %vm658 = vcmp.lt.s32.totalorder %v612, %v653
        %vm659 = vcmp.lt.s32.totalorder %v613, %v653
        %vm660 = vcmp.lt.s32.totalorder %v614, %v653
        %vm661 = vcmp.lt.s32.totalorder %v615, %v653
        %vm662 = vcmp.lt.s32.totalorder %v616, %v653
        %vm663 = vcmp.lt.s32.totalorder %v617, %v653
        %vm664 = vcmp.lt.s32.totalorder %v618, %v653
        %vm665 = vcmp.lt.s32.totalorder %v619, %v653
        %vm666 = vcmp.lt.s32.totalorder %v620, %v653
        %vm667 = vcmp.lt.s32.totalorder %v621, %v653
        %vm668 = vcmp.lt.s32.totalorder %v622, %v653
        %vm669 = vcmp.lt.s32.totalorder %v623, %v653
        %vm670 = vcmp.lt.s32.totalorder %v624, %v653
        %vm671 = vcmp.lt.s32.totalorder %v625, %v653
        %vm672 = vcmp.lt.s32.totalorder %v626, %v653
        %vm673 = vcmp.lt.s32.totalorder %v627, %v653
        %vm674 = vmand %vm633, %vm654
        %vm675 = vmand %vm634, %vm655
        %vm676 = vmand %vm635, %vm656
        %vm677 = vmand %vm636, %vm657
        %vm678 = vmand %vm637, %vm658
        %vm679 = vmand %vm638, %vm659
        %vm680 = vmand %vm639, %vm660
        %vm681 = vmand %vm640, %vm661
        %vm682 = vmand %vm641, %vm662
        %vm683 = vmand %vm642, %vm663
        %vm684 = vmand %vm643, %vm664
        %vm685 = vmand %vm644, %vm665
        %vm686 = vmand %vm645, %vm666
        %vm687 = vmand %vm646, %vm667
        %vm688 = vmand %vm647, %vm668
        %vm689 = vmand %vm648, %vm669
        %vm690 = vmand %vm649, %vm670
        %vm691 = vmand %vm650, %vm671
        %vm692 = vmand %vm651, %vm672
        %vm693 = vmand %vm652, %vm673
        %v694 = vsel %vm674, 1, 0
        %v695 = vsel %vm675, 1, 0
        %v696 = vsel %vm676, 1, 0
        %v697 = vsel %vm677, 1, 0
        %v698 = vsel %vm678, 1, 0
        %v699 = vsel %vm679, 1, 0
        %v700 = vsel %vm680, 1, 0
        %v701 = vsel %vm681, 1, 0
        %v702 = vsel %vm682, 1, 0
        %v703 = vsel %vm683, 1, 0
        %v704 = vsel %vm684, 1, 0
        %v705 = vsel %vm685, 1, 0
        %v706 = vsel %vm686, 1, 0
        %v707 = vsel %vm687, 1, 0
        %v708 = vsel %vm688, 1, 0
        %v709 = vsel %vm689, 1, 0
        %v710 = vsel %vm690, 1, 0
        %v711 = vsel %vm691, 1, 0
        %v712 = vsel %vm692, 1, 0
        %v713 = vsel %vm693, 1, 0
        %vm714 = vcmp.eq.s32.totalorder %v694, 1
        %vm715 = vcmp.eq.s32.totalorder %v695, 1
        %vm716 = vcmp.eq.s32.totalorder %v696, 1
        %vm717 = vcmp.eq.s32.totalorder %v697, 1
        %vm718 = vcmp.eq.s32.totalorder %v698, 1
        %vm719 = vcmp.eq.s32.totalorder %v699, 1
        %vm720 = vcmp.eq.s32.totalorder %v700, 1
        %vm721 = vcmp.eq.s32.totalorder %v701, 1
        %vm722 = vcmp.eq.s32.totalorder %v702, 1
        %vm723 = vcmp.eq.s32.totalorder %v703, 1
        %vm724 = vcmp.eq.s32.totalorder %v704, 1
        %vm725 = vcmp.eq.s32.totalorder %v705, 1
        %vm726 = vcmp.eq.s32.totalorder %v706, 1
        %vm727 = vcmp.eq.s32.totalorder %v707, 1
        %vm728 = vcmp.eq.s32.totalorder %v708, 1
        %vm729 = vcmp.eq.s32.totalorder %v709, 1
        %vm730 = vcmp.eq.s32.totalorder %v710, 1
        %vm731 = vcmp.eq.s32.totalorder %v711, 1
        %vm732 = vcmp.eq.s32.totalorder %v712, 1
        %vm733 = vcmp.eq.s32.totalorder %v713, 1
        %v734 = vsel %vm714, %v587, 0.0
        %v735 = vsel %vm715, %v588, 0.0
        %v736 = vsel %vm716, %v589, 0.0
        %v737 = vsel %vm717, %v590, 0.0
        %v738 = vsel %vm718, %v591, 0.0
        %v739 = vsel %vm719, %v592, 0.0
        %v740 = vsel %vm720, %v593, 0.0
        %v741 = vsel %vm721, %v594, 0.0
        %v742 = vsel %vm722, %v595, 0.0
        %v743 = vsel %vm723, %v596, 0.0
        %v744 = vsel %vm724, %v597, 0.0
        %v745 = vsel %vm725, %v598, 0.0
        %v746 = vsel %vm726, %v599, 0.0
        %v747 = vsel %vm727, %v600, 0.0
        %v748 = vsel %vm728, %v601, 0.0
        %v749 = vsel %vm729, %v602, 0.0
        %v750 = vsel %vm730, %v603, 0.0
        %v751 = vsel %vm731, %v604, 0.0
        %v752 = vsel %vm732, %v605, 0.0
        %v753 = vsel %vm733, %v606, 0.0
        %v754 = vld [vmem:[%s3] sm:$0x7]
        %v755 = vld [vmem:[%s3 + $0x4] sm:$0x7]
        %v756 = vld [vmem:[%s3 + $0x8] sm:$0x7]
        %v757 = vadd.s32 %v608, 4294967295
        %v758 = vadd.s32 %v609, 4294967295
        %vm759 = vcmp.ge.s32.totalorder %v757, 0
        %vm760 = vcmp.ge.s32.totalorder %v758, 0
        %vm761 = vcmp.lt.s32.totalorder %v757, 16
        %vm762 = vcmp.lt.s32.totalorder %v758, 16
        %vm763 = vmand %vm759, %vm761
        %vm764 = vmand %vm760, %vm762
        %v765 = vadd.s32 %v608, 1
        %v766 = vadd.s32 %v609, 1
        %vm767 = vcmp.ge.s32.totalorder %v765, 0
        %vm768 = vcmp.ge.s32.totalorder %v766, 0
        %vm769 = vcmp.lt.s32.totalorder %v765, 16
        %vm770 = vcmp.lt.s32.totalorder %v766, 16
        %vm771 = vmand %vm767, %vm769
        %vm772 = vmand %vm768, %vm770
        %v773 = vlaneseq
        %v774 = vshrl.u32 %v773, 7
        %v775 = vsub.s32 1, %v774
        %v776 = vrot.slane %v755, %v775
        %v777 = vmul.f32 %v736, %v776
        %v778 = vmul.f32 %v737, %v776
        %v779 = vmul.f32 %v738, %v776
        %v780 = vmul.f32 %v739, %v776
        %v781 = vmul.f32 %v740, %v776
        %v782 = vmul.f32 %v741, %v776
        %v783 = vmul.f32 %v742, %v776
        %v784 = vmul.f32 %v743, %v776
        %v785 = vmul.f32 %v744, %v776
        %v786 = vmul.f32 %v745, %v776
        %v787 = vmul.f32 %v746, %v776
        %v788 = vmul.f32 %v747, %v776
        %v789 = vmul.f32 %v748, %v776
        %v790 = vmul.f32 %v749, %v776
        %v791 = vmul.f32 %v750, %v776
        %v792 = vmul.f32 %v751, %v776
        %v793 = vrot.slane %v734, 7
        %v794 = vrot.slane %v736, 7
        %v795 = vrot.slane %v738, 7
        %v796 = vrot.slane %v740, 7
        %v797 = vrot.slane %v742, 7
        %v798 = vrot.slane %v744, 7
        %v799 = vrot.slane %v746, 7
        %v800 = vrot.slane %v748, 7
        %v801 = vrot.slane %v750, 7
        %v802 = vrot.slane %v752, 7
        %v803 = vrot.slane %v735, 7
        %v804 = vrot.slane %v737, 7
        %v805 = vrot.slane %v739, 7
        %v806 = vrot.slane %v741, 7
        %v807 = vrot.slane %v743, 7
        %v808 = vrot.slane %v745, 7
        %v809 = vrot.slane %v747, 7
        %v810 = vrot.slane %v749, 7
        %v811 = vrot.slane %v751, 7
        %v812 = vrot.slane %v753, 7
        %vm813 = vcmp.lt.s32.totalorder %v608, 1
        %v814 = vsel %vm813, %v793, %v803
        %v815 = vsel %vm813, %v794, %v804
        %v816 = vsel %vm813, %v795, %v805
        %v817 = vsel %vm813, %v796, %v806
        %v818 = vsel %vm813, %v797, %v807
        %v819 = vsel %vm813, %v798, %v808
        %v820 = vsel %vm813, %v799, %v809
        %v821 = vsel %vm813, %v800, %v810
        %v822 = vsel %vm813, %v801, %v811
        %v823 = vsel %vm813, %v802, %v812
        %v824 = vsel %vm813, %v803, %v793
        %v825 = vsel %vm813, %v804, %v794
        %v826 = vsel %vm813, %v805, %v795
        %v827 = vsel %vm813, %v806, %v796
        %v828 = vsel %vm813, %v807, %v797
        %v829 = vsel %vm813, %v808, %v798
        %v830 = vsel %vm813, %v809, %v799
        %v831 = vsel %vm813, %v810, %v800
        %v832 = vsel %vm813, %v811, %v801
        %v833 = vsel %vm813, %v812, %v802
        %v834 = vsel %vm763, 1, 0
        %v835 = vsel %vm764, 1, 0
        %vm836 = vcmp.eq.s32.totalorder %v834, 1
        %vm837 = vcmp.eq.s32.totalorder %v835, 1
        %v838 = vsel %vm836, %v824, 0.0
        %v839 = vsel %vm837, %v814, 0.0
        %v840 = vsel %vm836, %v825, 0.0
        %v841 = vsel %vm837, %v815, 0.0
        %v842 = vsel %vm836, %v826, 0.0
        %v843 = vsel %vm837, %v816, 0.0
        %v844 = vsel %vm836, %v827, 0.0
        %v845 = vsel %vm837, %v817, 0.0
        %v846 = vsel %vm836, %v828, 0.0
        %v847 = vsel %vm837, %v818, 0.0
        %v848 = vsel %vm836, %v829, 0.0
        %v849 = vsel %vm837, %v819, 0.0
        %v850 = vsel %vm836, %v830, 0.0
        %v851 = vsel %vm837, %v820, 0.0
        %v852 = vsel %vm836, %v831, 0.0
        %v853 = vsel %vm837, %v821, 0.0
        %v854 = vsel %vm836, %v832, 0.0
        %v855 = vsel %vm837, %v822, 0.0
        %v856 = vsel %vm836, %v833, 0.0
        %v857 = vsel %vm837, %v823, 0.0
        %v858 = vlaneseq
        %v859 = vshrl.u32 %v858, 7
        %v860 = vsub.s32 0, %v859
        %v861 = vrot.slane %v754, %v860
        %v862 = vmul.f32 %v838, %v861
        %v863 = vmul.f32 %v839, %v861
        %v864 = vmul.f32 %v840, %v861
        %v865 = vmul.f32 %v841, %v861
        %v866 = vmul.f32 %v842, %v861
        %v867 = vmul.f32 %v843, %v861
        %v868 = vmul.f32 %v844, %v861
        %v869 = vmul.f32 %v845, %v861
        %v870 = vmul.f32 %v846, %v861
        %v871 = vmul.f32 %v847, %v861
        %v872 = vmul.f32 %v848, %v861
        %v873 = vmul.f32 %v849, %v861
        %v874 = vmul.f32 %v850, %v861
        %v875 = vmul.f32 %v851, %v861
        %v876 = vmul.f32 %v852, %v861
        %v877 = vmul.f32 %v853, %v861
        %v878 = vadd.f32 %v777, %v862
        %v879 = vadd.f32 %v778, %v863
        %v880 = vadd.f32 %v779, %v864
        %v881 = vadd.f32 %v780, %v865
        %v882 = vadd.f32 %v781, %v866
        %v883 = vadd.f32 %v782, %v867
        %v884 = vadd.f32 %v783, %v868
        %v885 = vadd.f32 %v784, %v869
        %v886 = vadd.f32 %v785, %v870
        %v887 = vadd.f32 %v786, %v871
        %v888 = vadd.f32 %v787, %v872
        %v889 = vadd.f32 %v788, %v873
        %v890 = vadd.f32 %v789, %v874
        %v891 = vadd.f32 %v790, %v875
        %v892 = vadd.f32 %v791, %v876
        %v893 = vadd.f32 %v792, %v877
        %v894 = vlaneseq
        %v895 = vshrl.u32 %v894, 7
        %v896 = vsub.s32 0, %v895
        %v897 = vrot.slane %v755, %v896
        %v898 = vmul.f32 %v840, %v897
        %v899 = vmul.f32 %v841, %v897
        %v900 = vmul.f32 %v842, %v897
        %v901 = vmul.f32 %v843, %v897
        %v902 = vmul.f32 %v844, %v897
        %v903 = vmul.f32 %v845, %v897
        %v904 = vmul.f32 %v846, %v897
        %v905 = vmul.f32 %v847, %v897
        %v906 = vmul.f32 %v848, %v897
        %v907 = vmul.f32 %v849, %v897
        %v908 = vmul.f32 %v850, %v897
        %v909 = vmul.f32 %v851, %v897
        %v910 = vmul.f32 %v852, %v897
        %v911 = vmul.f32 %v853, %v897
        %v912 = vmul.f32 %v854, %v897
        %v913 = vmul.f32 %v855, %v897
        %v914 = vadd.f32 %v878, %v898
        %v915 = vadd.f32 %v879, %v899
        %v916 = vadd.f32 %v880, %v900
        %v917 = vadd.f32 %v881, %v901
        %v918 = vadd.f32 %v882, %v902
        %v919 = vadd.f32 %v883, %v903
        %v920 = vadd.f32 %v884, %v904
        %v921 = vadd.f32 %v885, %v905
        %v922 = vadd.f32 %v886, %v906
        %v923 = vadd.f32 %v887, %v907
        %v924 = vadd.f32 %v888, %v908
        %v925 = vadd.f32 %v889, %v909
        %v926 = vadd.f32 %v890, %v910
        %v927 = vadd.f32 %v891, %v911
        %v928 = vadd.f32 %v892, %v912
        %v929 = vadd.f32 %v893, %v913
        %v930 = vlaneseq
        %v931 = vshrl.u32 %v930, 7
        %v932 = vsub.s32 0, %v931
        %v933 = vrot.slane %v756, %v932
        %v934 = vmul.f32 %v842, %v933
        %v935 = vmul.f32 %v843, %v933
        %v936 = vmul.f32 %v844, %v933
        %v937 = vmul.f32 %v845, %v933
        %v938 = vmul.f32 %v846, %v933
        %v939 = vmul.f32 %v847, %v933
        %v940 = vmul.f32 %v848, %v933
        %v941 = vmul.f32 %v849, %v933
        %v942 = vmul.f32 %v850, %v933
        %v943 = vmul.f32 %v851, %v933
        %v944 = vmul.f32 %v852, %v933
        %v945 = vmul.f32 %v853, %v933
        %v946 = vmul.f32 %v854, %v933
        %v947 = vmul.f32 %v855, %v933
        %v948 = vmul.f32 %v856, %v933
        %v949 = vmul.f32 %v857, %v933
        %v950 = vadd.f32 %v914, %v934
        %v951 = vadd.f32 %v915, %v935
        %v952 = vadd.f32 %v916, %v936
        %v953 = vadd.f32 %v917, %v937
        %v954 = vadd.f32 %v918, %v938
        %v955 = vadd.f32 %v919, %v939
        %v956 = vadd.f32 %v920, %v940
        %v957 = vadd.f32 %v921, %v941
        %v958 = vadd.f32 %v922, %v942
        %v959 = vadd.f32 %v923, %v943
        %v960 = vadd.f32 %v924, %v944
        %v961 = vadd.f32 %v925, %v945
        %v962 = vadd.f32 %v926, %v946
        %v963 = vadd.f32 %v927, %v947
        %v964 = vadd.f32 %v928, %v948
        %v965 = vadd.f32 %v929, %v949
        %v966 = vlaneseq
        %v967 = vshrl.u32 %v966, 7
        %v968 = vsub.s32 1, %v967
        %v969 = vrot.slane %v754, %v968
        %v970 = vmul.f32 %v734, %v969
        %v971 = vmul.f32 %v735, %v969
        %v972 = vmul.f32 %v736, %v969
        %v973 = vmul.f32 %v737, %v969
        %v974 = vmul.f32 %v738, %v969
        %v975 = vmul.f32 %v739, %v969
        %v976 = vmul.f32 %v740, %v969
        %v977 = vmul.f32 %v741, %v969
        %v978 = vmul.f32 %v742, %v969
        %v979 = vmul.f32 %v743, %v969
        %v980 = vmul.f32 %v744, %v969
        %v981 = vmul.f32 %v745, %v969
        %v982 = vmul.f32 %v746, %v969
        %v983 = vmul.f32 %v747, %v969
        %v984 = vmul.f32 %v748, %v969
        %v985 = vmul.f32 %v749, %v969
        %v986 = vadd.f32 %v950, %v970
        %v987 = vadd.f32 %v951, %v971
        %v988 = vadd.f32 %v952, %v972
        %v989 = vadd.f32 %v953, %v973
        %v990 = vadd.f32 %v954, %v974
        %v991 = vadd.f32 %v955, %v975
        %v992 = vadd.f32 %v956, %v976
        %v993 = vadd.f32 %v957, %v977
        %v994 = vadd.f32 %v958, %v978
        %v995 = vadd.f32 %v959, %v979
        %v996 = vadd.f32 %v960, %v980
        %v997 = vadd.f32 %v961, %v981
        %v998 = vadd.f32 %v962, %v982
        %v999 = vadd.f32 %v963, %v983
        %v1000 = vadd.f32 %v964, %v984
        %v1001 = vadd.f32 %v965, %v985
        %v1002 = vlaneseq
        %v1003 = vshrl.u32 %v1002, 7
        %v1004 = vsub.s32 1, %v1003
        %v1005 = vrot.slane %v756, %v1004
        %v1006 = vmul.f32 %v738, %v1005
        %v1007 = vmul.f32 %v739, %v1005
        %v1008 = vmul.f32 %v740, %v1005
        %v1009 = vmul.f32 %v741, %v1005
        %v1010 = vmul.f32 %v742, %v1005
        %v1011 = vmul.f32 %v743, %v1005
        %v1012 = vmul.f32 %v744, %v1005
        %v1013 = vmul.f32 %v745, %v1005
        %v1014 = vmul.f32 %v746, %v1005
        %v1015 = vmul.f32 %v747, %v1005
        %v1016 = vmul.f32 %v748, %v1005
        %v1017 = vmul.f32 %v749, %v1005
        %v1018 = vmul.f32 %v750, %v1005
        %v1019 = vmul.f32 %v751, %v1005
        %v1020 = vmul.f32 %v752, %v1005
        %v1021 = vmul.f32 %v753, %v1005
        %v1022 = vadd.f32 %v986, %v1006
        %v1023 = vadd.f32 %v987, %v1007
        %v1024 = vadd.f32 %v988, %v1008
        %v1025 = vadd.f32 %v989, %v1009
        %v1026 = vadd.f32 %v990, %v1010
        %v1027 = vadd.f32 %v991, %v1011
        %v1028 = vadd.f32 %v992, %v1012
        %v1029 = vadd.f32 %v993, %v1013
        %v1030 = vadd.f32 %v994, %v1014
        %v1031 = vadd.f32 %v995, %v1015
        %v1032 = vadd.f32 %v996, %v1016
        %v1033 = vadd.f32 %v997, %v1017
        %v1034 = vadd.f32 %v998, %v1018
        %v1035 = vadd.f32 %v999, %v1019
        %v1036 = vadd.f32 %v1000, %v1020
        %v1037 = vadd.f32 %v1001, %v1021
        %v1038 = vrot.slane %v734, 1
        %v1039 = vrot.slane %v736, 1
        %v1040 = vrot.slane %v738, 1
        %v1041 = vrot.slane %v740, 1
        %v1042 = vrot.slane %v742, 1
        %v1043 = vrot.slane %v744, 1
        %v1044 = vrot.slane %v746, 1
        %v1045 = vrot.slane %v748, 1
        %v1046 = vrot.slane %v750, 1
        %v1047 = vrot.slane %v752, 1
        %v1048 = vrot.slane %v735, 1
        %v1049 = vrot.slane %v737, 1
        %v1050 = vrot.slane %v739, 1
        %v1051 = vrot.slane %v741, 1
        %v1052 = vrot.slane %v743, 1
        %v1053 = vrot.slane %v745, 1
        %v1054 = vrot.slane %v747, 1
        %v1055 = vrot.slane %v749, 1
        %v1056 = vrot.slane %v751, 1
        %v1057 = vrot.slane %v753, 1
        %vm1058 = vcmp.lt.s32.totalorder %v608, 7
        %v1059 = vsel %vm1058, %v1038, %v1048
        %v1060 = vsel %vm1058, %v1039, %v1049
        %v1061 = vsel %vm1058, %v1040, %v1050
        %v1062 = vsel %vm1058, %v1041, %v1051
        %v1063 = vsel %vm1058, %v1042, %v1052
        %v1064 = vsel %vm1058, %v1043, %v1053
        %v1065 = vsel %vm1058, %v1044, %v1054
        %v1066 = vsel %vm1058, %v1045, %v1055
        %v1067 = vsel %vm1058, %v1046, %v1056
        %v1068 = vsel %vm1058, %v1047, %v1057
        %v1069 = vsel %vm1058, %v1048, %v1038
        %v1070 = vsel %vm1058, %v1049, %v1039
        %v1071 = vsel %vm1058, %v1050, %v1040
        %v1072 = vsel %vm1058, %v1051, %v1041
        %v1073 = vsel %vm1058, %v1052, %v1042
        %v1074 = vsel %vm1058, %v1053, %v1043
        %v1075 = vsel %vm1058, %v1054, %v1044
        %v1076 = vsel %vm1058, %v1055, %v1045
        %v1077 = vsel %vm1058, %v1056, %v1046
        %v1078 = vsel %vm1058, %v1057, %v1047
        %v1079 = vsel %vm771, 1, 0
        %v1080 = vsel %vm772, 1, 0
        %vm1081 = vcmp.eq.s32.totalorder %v1079, 1
        %vm1082 = vcmp.eq.s32.totalorder %v1080, 1
        %v1083 = vsel %vm1081, %v1059, 0.0
        %v1084 = vsel %vm1082, %v1069, 0.0
        %v1085 = vsel %vm1081, %v1060, 0.0
        %v1086 = vsel %vm1082, %v1070, 0.0
        %v1087 = vsel %vm1081, %v1061, 0.0
        %v1088 = vsel %vm1082, %v1071, 0.0
        %v1089 = vsel %vm1081, %v1062, 0.0
        %v1090 = vsel %vm1082, %v1072, 0.0
        %v1091 = vsel %vm1081, %v1063, 0.0
        %v1092 = vsel %vm1082, %v1073, 0.0
        %v1093 = vsel %vm1081, %v1064, 0.0
        %v1094 = vsel %vm1082, %v1074, 0.0
        %v1095 = vsel %vm1081, %v1065, 0.0
        %v1096 = vsel %vm1082, %v1075, 0.0
        %v1097 = vsel %vm1081, %v1066, 0.0
        %v1098 = vsel %vm1082, %v1076, 0.0
        %v1099 = vsel %vm1081, %v1067, 0.0
        %v1100 = vsel %vm1082, %v1077, 0.0
        %v1101 = vsel %vm1081, %v1068, 0.0
        %v1102 = vsel %vm1082, %v1078, 0.0
        %v1103 = vlaneseq
        %v1104 = vshrl.u32 %v1103, 7
        %v1105 = vsub.s32 2, %v1104
        %v1106 = vrot.slane %v754, %v1105
        %v1107 = vmul.f32 %v1083, %v1106
        %v1108 = vmul.f32 %v1084, %v1106
        %v1109 = vmul.f32 %v1085, %v1106
        %v1110 = vmul.f32 %v1086, %v1106
        %v1111 = vmul.f32 %v1087, %v1106
        %v1112 = vmul.f32 %v1088, %v1106
        %v1113 = vmul.f32 %v1089, %v1106
        %v1114 = vmul.f32 %v1090, %v1106
        %v1115 = vmul.f32 %v1091, %v1106
        %v1116 = vmul.f32 %v1092, %v1106
        %v1117 = vmul.f32 %v1093, %v1106
        %v1118 = vmul.f32 %v1094, %v1106
        %v1119 = vmul.f32 %v1095, %v1106
        %v1120 = vmul.f32 %v1096, %v1106
        %v1121 = vmul.f32 %v1097, %v1106
        %v1122 = vmul.f32 %v1098, %v1106
        %v1123 = vadd.f32 %v1022, %v1107
        %v1124 = vadd.f32 %v1023, %v1108
        %v1125 = vadd.f32 %v1024, %v1109
        %v1126 = vadd.f32 %v1025, %v1110
        %v1127 = vadd.f32 %v1026, %v1111
        %v1128 = vadd.f32 %v1027, %v1112
        %v1129 = vadd.f32 %v1028, %v1113
        %v1130 = vadd.f32 %v1029, %v1114
        %v1131 = vadd.f32 %v1030, %v1115
        %v1132 = vadd.f32 %v1031, %v1116
        %v1133 = vadd.f32 %v1032, %v1117
        %v1134 = vadd.f32 %v1033, %v1118
        %v1135 = vadd.f32 %v1034, %v1119
        %v1136 = vadd.f32 %v1035, %v1120
        %v1137 = vadd.f32 %v1036, %v1121
        %v1138 = vadd.f32 %v1037, %v1122
        %v1139 = vlaneseq
        %v1140 = vshrl.u32 %v1139, 7
        %v1141 = vsub.s32 2, %v1140
        %v1142 = vrot.slane %v755, %v1141
        %v1143 = vmul.f32 %v1085, %v1142
        %v1144 = vmul.f32 %v1086, %v1142
        %v1145 = vmul.f32 %v1087, %v1142
        %v1146 = vmul.f32 %v1088, %v1142
        %v1147 = vmul.f32 %v1089, %v1142
        %v1148 = vmul.f32 %v1090, %v1142
        %v1149 = vmul.f32 %v1091, %v1142
        %v1150 = vmul.f32 %v1092, %v1142
        %v1151 = vmul.f32 %v1093, %v1142
        %v1152 = vmul.f32 %v1094, %v1142
        %v1153 = vmul.f32 %v1095, %v1142
        %v1154 = vmul.f32 %v1096, %v1142
        %v1155 = vmul.f32 %v1097, %v1142
        %v1156 = vmul.f32 %v1098, %v1142
        %v1157 = vmul.f32 %v1099, %v1142
        %v1158 = vmul.f32 %v1100, %v1142
        %v1159 = vadd.f32 %v1123, %v1143
        %v1160 = vadd.f32 %v1124, %v1144
        %v1161 = vadd.f32 %v1125, %v1145
        %v1162 = vadd.f32 %v1126, %v1146
        %v1163 = vadd.f32 %v1127, %v1147
        %v1164 = vadd.f32 %v1128, %v1148
        %v1165 = vadd.f32 %v1129, %v1149
        %v1166 = vadd.f32 %v1130, %v1150
        %v1167 = vadd.f32 %v1131, %v1151
        %v1168 = vadd.f32 %v1132, %v1152
        %v1169 = vadd.f32 %v1133, %v1153
        %v1170 = vadd.f32 %v1134, %v1154
        %v1171 = vadd.f32 %v1135, %v1155
        %v1172 = vadd.f32 %v1136, %v1156
        %v1173 = vadd.f32 %v1137, %v1157
        %v1174 = vadd.f32 %v1138, %v1158
        %v1175 = vlaneseq
        %v1176 = vshrl.u32 %v1175, 7
        %v1177 = vsub.s32 2, %v1176
        %v1178 = vrot.slane %v756, %v1177
        %v1179 = vmul.f32 %v1087, %v1178
        %v1180 = vmul.f32 %v1088, %v1178
        %v1181 = vmul.f32 %v1089, %v1178
        %v1182 = vmul.f32 %v1090, %v1178
        %v1183 = vmul.f32 %v1091, %v1178
        %v1184 = vmul.f32 %v1092, %v1178
        %v1185 = vmul.f32 %v1093, %v1178
        %v1186 = vmul.f32 %v1094, %v1178
        %v1187 = vmul.f32 %v1095, %v1178
        %v1188 = vmul.f32 %v1096, %v1178
        %v1189 = vmul.f32 %v1097, %v1178
        %v1190 = vmul.f32 %v1098, %v1178
        %v1191 = vmul.f32 %v1099, %v1178
        %v1192 = vmul.f32 %v1100, %v1178
        %v1193 = vmul.f32 %v1101, %v1178
        %v1194 = vmul.f32 %v1102, %v1178
        %v1195 = vadd.f32 %v1159, %v1179
        %v1196 = vadd.f32 %v1160, %v1180
        %v1197 = vadd.f32 %v1161, %v1181
        %v1198 = vadd.f32 %v1162, %v1182
        %v1199 = vadd.f32 %v1163, %v1183
        %v1200 = vadd.f32 %v1164, %v1184
        %v1201 = vadd.f32 %v1165, %v1185
        %v1202 = vadd.f32 %v1166, %v1186
        %v1203 = vadd.f32 %v1167, %v1187
        %v1204 = vadd.f32 %v1168, %v1188
        %v1205 = vadd.f32 %v1169, %v1189
        %v1206 = vadd.f32 %v1170, %v1190
        %v1207 = vadd.f32 %v1171, %v1191
        %v1208 = vadd.f32 %v1172, %v1192
        %v1209 = vadd.f32 %v1173, %v1193
        %v1210 = vadd.f32 %v1174, %v1194
        %v1211 = vld [vmem:[%s4] sm:$0x1]
        %v1213 = vlaneseq
        %v1214 = vshrl.u32 %v1213, 7
        %v1215 = vsub.s32 0, %v1214
        %v1216 = vrot.slane %v1211, %v1215
        %v1218 = vadd.f32 %v1195, %v1216
        %v1219 = vadd.f32 %v1196, %v1216
        %v1220 = vadd.f32 %v1197, %v1216
        %v1221 = vadd.f32 %v1198, %v1216
        %v1222 = vadd.f32 %v1199, %v1216
        %v1223 = vadd.f32 %v1200, %v1216
        %v1224 = vadd.f32 %v1201, %v1216
        %v1225 = vadd.f32 %v1202, %v1216
        %v1226 = vadd.f32 %v1203, %v1216
        %v1227 = vadd.f32 %v1204, %v1216
        %v1228 = vadd.f32 %v1205, %v1216
        %v1229 = vadd.f32 %v1206, %v1216
        %v1230 = vadd.f32 %v1207, %v1216
        %v1231 = vadd.f32 %v1208, %v1216
        %v1232 = vadd.f32 %v1209, %v1216
        %v1233 = vadd.f32 %v1210, %v1216
        %v1234 = vxor.u32 %v1218, 2147483648
        %v1235 = vxor.u32 %v1219, 2147483648
        %v1236 = vxor.u32 %v1220, 2147483648
        %v1237 = vxor.u32 %v1221, 2147483648
        %v1238 = vxor.u32 %v1222, 2147483648
        %v1239 = vxor.u32 %v1223, 2147483648
        %v1240 = vxor.u32 %v1224, 2147483648
        %v1241 = vxor.u32 %v1225, 2147483648
        %v1242 = vxor.u32 %v1226, 2147483648
        %v1243 = vxor.u32 %v1227, 2147483648
        %v1244 = vxor.u32 %v1228, 2147483648
        %v1245 = vxor.u32 %v1229, 2147483648
        %v1246 = vxor.u32 %v1230, 2147483648
        %v1247 = vxor.u32 %v1231, 2147483648
        %v1248 = vxor.u32 %v1232, 2147483648
        %v1249 = vxor.u32 %v1233, 2147483648
        %v1250 = vmul.f32 %v1234, 1.442695
        %v1251 = vpow.pop %v1250
        %v1252 = vmul.f32 %v1235, 1.442695
        %v1253 = vpow.pop %v1252
        %v1254 = vmul.f32 %v1236, 1.442695
        %v1255 = vpow.pop %v1254
        %v1256 = vmul.f32 %v1237, 1.442695
        %v1257 = vpow.pop %v1256
        %v1258 = vmul.f32 %v1238, 1.442695
        %v1259 = vpow.pop %v1258
        %v1260 = vmul.f32 %v1239, 1.442695
        %v1261 = vpow.pop %v1260
        %v1262 = vmul.f32 %v1240, 1.442695
        %v1263 = vpow.pop %v1262
        %v1264 = vmul.f32 %v1241, 1.442695
        %v1265 = vpow.pop %v1264
        %v1266 = vmul.f32 %v1242, 1.442695
        %v1267 = vpow.pop %v1266
        %v1268 = vmul.f32 %v1243, 1.442695
        %v1269 = vpow.pop %v1268
        %v1270 = vmul.f32 %v1244, 1.442695
        %v1271 = vpow.pop %v1270
        %v1272 = vmul.f32 %v1245, 1.442695
        %v1273 = vpow.pop %v1272
        %v1274 = vmul.f32 %v1246, 1.442695
        %v1275 = vpow.pop %v1274
        %v1276 = vmul.f32 %v1247, 1.442695
        %v1277 = vpow.pop %v1276
        %v1278 = vmul.f32 %v1248, 1.442695
        %v1279 = vpow.pop %v1278
        %v1280 = vmul.f32 %v1249, 1.442695
        %v1281 = vpow.pop %v1280
        %v1282 = vadd.f32 %v1251, 1.0
        %v1283 = vadd.f32 %v1253, 1.0
        %v1284 = vadd.f32 %v1255, 1.0
        %v1285 = vadd.f32 %v1257, 1.0
        %v1286 = vadd.f32 %v1259, 1.0
        %v1287 = vadd.f32 %v1261, 1.0
        %v1288 = vadd.f32 %v1263, 1.0
        %v1289 = vadd.f32 %v1265, 1.0
        %v1290 = vadd.f32 %v1267, 1.0
        %v1291 = vadd.f32 %v1269, 1.0
        %v1292 = vadd.f32 %v1271, 1.0
        %v1293 = vadd.f32 %v1273, 1.0
        %v1294 = vadd.f32 %v1275, 1.0
        %v1295 = vadd.f32 %v1277, 1.0
        %v1296 = vadd.f32 %v1279, 1.0
        %v1297 = vadd.f32 %v1281, 1.0
        %v1298 = vrcp.pop %v1282
        %v1299 = vmul.f32 1.0, %v1298
        %v1300 = vrcp.pop %v1283
        %v1301 = vmul.f32 1.0, %v1300
        %v1302 = vrcp.pop %v1284
        %v1303 = vmul.f32 1.0, %v1302
        %v1304 = vrcp.pop %v1285
        %v1305 = vmul.f32 1.0, %v1304
        %v1306 = vrcp.pop %v1286
        %v1307 = vmul.f32 1.0, %v1306
        %v1308 = vrcp.pop %v1287
        %v1309 = vmul.f32 1.0, %v1308
        %v1310 = vrcp.pop %v1288
        %v1311 = vmul.f32 1.0, %v1310
        %v1312 = vrcp.pop %v1289
        %v1313 = vmul.f32 1.0, %v1312
        %v1314 = vrcp.pop %v1290
        %v1315 = vmul.f32 1.0, %v1314
        %v1316 = vrcp.pop %v1291
        %v1317 = vmul.f32 1.0, %v1316
        %v1318 = vrcp.pop %v1292
        %v1319 = vmul.f32 1.0, %v1318
        %v1320 = vrcp.pop %v1293
        %v1321 = vmul.f32 1.0, %v1320
        %v1322 = vrcp.pop %v1294
        %v1323 = vmul.f32 1.0, %v1322
        %v1324 = vrcp.pop %v1295
        %v1325 = vmul.f32 1.0, %v1324
        %v1326 = vrcp.pop %v1296
        %v1327 = vmul.f32 1.0, %v1326
        %v1328 = vrcp.pop %v1297
        %v1329 = vmul.f32 1.0, %v1328
        %v1330 = vmul.f32 %v1218, %v1299
        %v1331 = vmul.f32 %v1219, %v1301
        %v1332 = vmul.f32 %v1220, %v1303
        %v1333 = vmul.f32 %v1221, %v1305
        %v1334 = vmul.f32 %v1222, %v1307
        %v1335 = vmul.f32 %v1223, %v1309
        %v1336 = vmul.f32 %v1224, %v1311
        %v1337 = vmul.f32 %v1225, %v1313
        %v1338 = vmul.f32 %v1226, %v1315
        %v1339 = vmul.f32 %v1227, %v1317
        %v1340 = vmul.f32 %v1228, %v1319
        %v1341 = vmul.f32 %v1229, %v1321
        %v1342 = vmul.f32 %v1230, %v1323
        %v1343 = vmul.f32 %v1231, %v1325
        %v1344 = vmul.f32 %v1232, %v1327
        %v1345 = vmul.f32 %v1233, %v1329
        %v1346 = vadd.f32 %v1330, %v1331
        %v1347 = vadd.f32 %v1346, %v1332
        %v1348 = vadd.f32 %v1347, %v1333
        %v1349 = vadd.f32 %v1348, %v1334
        %v1350 = vadd.f32 %v1349, %v1335
        %v1351 = vadd.f32 %v1350, %v1336
        %v1352 = vadd.f32 %v1351, %v1337
        %v1353 = vadd.f32 %v1352, %v1338
        %v1354 = vadd.f32 %v1353, %v1339
        %v1355 = vadd.f32 %v1354, %v1340
        %v1356 = vadd.f32 %v1355, %v1341
        %v1357 = vadd.f32 %v1356, %v1342
        %v1358 = vadd.f32 %v1357, %v1343
        %v1359 = vadd.f32 %v1358, %v1344
        %v1360 = vadd.f32 %v1359, %v1345
        %v1361 = vrot.slane %v1360, 4
        %v1362 = vadd.f32 %v1360, %v1361
        %v1363 = vrot.slane %v1362, 2
        %v1364 = vadd.f32 %v1362, %v1363
        %v1365 = vrot.slane %v1364, 1
        %v1366 = vadd.f32 %v1364, %v1365
        %1367 = vst [vmem:[%s270] sm:$0x1] %v1366
        %v1368 = vpack.c.bf16 %v1331, %v1330
        %v1369 = vpack.c.bf16 %v1333, %v1332
        %v1370 = vpack.c.bf16 %v1335, %v1334
        %v1371 = vpack.c.bf16 %v1337, %v1336
        %v1372 = vpack.c.bf16 %v1339, %v1338
        %v1373 = vpack.c.bf16 %v1341, %v1340
        %v1374 = vpack.c.bf16 %v1343, %v1342
        %v1375 = vpack.c.bf16 %v1345, %v1344
        %v1384 = vunpack.c.l.b16 %v1368
        %v1385 = vunpack.c.h.b16 %v1368
        %v1386 = vunpack.c.l.b16 %v1369
        %v1387 = vunpack.c.h.b16 %v1369
        %v1388 = vunpack.c.l.b16 %v1370
        %v1389 = vunpack.c.h.b16 %v1370
        %v1390 = vunpack.c.l.b16 %v1371
        %v1391 = vunpack.c.h.b16 %v1371
        %v1392 = vunpack.c.l.b16 %v1372
        %v1393 = vunpack.c.h.b16 %v1372
        %v1394 = vunpack.c.l.b16 %v1373
        %v1395 = vunpack.c.h.b16 %v1373
        %v1396 = vunpack.c.l.b16 %v1374
        %v1397 = vunpack.c.h.b16 %v1374
        %v1398 = vunpack.c.l.b16 %v1375
        %v1399 = vunpack.c.h.b16 %v1375
        %v1400 = vpack.c.b16 %v1384, %v1384
        %v1401 = vpack.c.b16 %v1385, %v1385
        %v1402 = vpack.c.b16 %v1386, %v1386
        %v1403 = vpack.c.b16 %v1387, %v1387
        %v1404 = vpack.c.b16 %v1388, %v1388
        %v1405 = vpack.c.b16 %v1389, %v1389
        %v1406 = vpack.c.b16 %v1390, %v1390
        %v1407 = vpack.c.b16 %v1391, %v1391
        %v1408 = vpack.c.b16 %v1392, %v1392
        %v1409 = vpack.c.b16 %v1393, %v1393
        %v1410 = vpack.c.b16 %v1394, %v1394
        %v1411 = vpack.c.b16 %v1395, %v1395
        %v1412 = vpack.c.b16 %v1396, %v1396
        %v1413 = vpack.c.b16 %v1397, %v1397
        %v1414 = vpack.c.b16 %v1398, %v1398
        %v1415 = vpack.c.b16 %v1399, %v1399
        %1432 = vst [vmem:[%s264] sm:$0xf] %v1400
        %1433 = vst [vmem:[%s264 + $0x4] sm:$0xf] %v1401
        %1434 = vst [vmem:[%s264 + $0x8] sm:$0xf] %v1402
        %1435 = vst [vmem:[%s264 + $0xc] sm:$0xf] %v1403
        %1436 = vst [vmem:[%s264 + $0x10] sm:$0xf] %v1404
        %1437 = vst [vmem:[%s264 + $0x14] sm:$0xf] %v1405
        %1438 = vst [vmem:[%s264 + $0x18] sm:$0xf] %v1406
        %1439 = vst [vmem:[%s264 + $0x1c] sm:$0xf] %v1407
        %1440 = vst [vmem:[%s264 + $0x20] sm:$0xf] %v1408
        %1441 = vst [vmem:[%s264 + $0x24] sm:$0xf] %v1409
        %1442 = vst [vmem:[%s264 + $0x28] sm:$0xf] %v1410
        %1443 = vst [vmem:[%s264 + $0x2c] sm:$0xf] %v1411
        %1444 = vst [vmem:[%s264 + $0x30] sm:$0xf] %v1412
        %1445 = vst [vmem:[%s264 + $0x34] sm:$0xf] %v1413
        %1446 = vst [vmem:[%s264 + $0x38] sm:$0xf] %v1414
        %1447 = vst [vmem:[%s264 + $0x3c] sm:$0xf] %v1415
        %s1448 = sand.u32 %s156, 1
        %s1449 = scalar_lea.sflag [#allocation3], %s1448
        %s1450 = sand.u32 %s156, 1
        %s1451 = smul.addr %s1450, 64
        %s1452 = scalar_lea.vmem [#allocation2], %s1451
        %s1453 = sand.u32 %s184, 1
        %s1454 = scalar_lea.sflag [#allocation5], %s1453
        %s1455 = sand.u32 %s184, 1
        %s1456 = scalar_lea.vmem [#allocation4], %s1455
        // Predicated region
        $region41: #{tpu_custom_call.1} parent=39 // pred_check
          %p1457 = pneg %p166
        $region42: #{tpu_custom_call.1} parent=39 // pred_check_branch
          %1459 = sbr.rel (%p1457) target = $region44
        $region43: #{tpu_custom_call.1} parent=39 // pred_region
          %s1460 = smul.u32 8, %s29
          %s1462 = ssub.s32 1024, 1024
          %1463 = vsyncadd %s1449, %s1462
          %s1464 = smul.addr %s1460, 2
          %s1465 = smul.addr %s28, 32
          %s1466 = sadd.s32 %s1464, %s1465
          %s1467 = smul.addr %s1466, 64
          %s1468 = scalar_lea.hbm %s5, %s1467
          %s1469 = sshll.u32 %s1452, 4
          %s1470 = int_to_ptr.vmem [resolvable:$true] %s1469
          %1475 = dma.vmem_to_hbm [thread:$0]  %s1470, 1024, %s1468, %s1449, 64, 64, 4
        $region44: #{tpu_custom_call.1} parent=39 // pred_fallthru
          _
        // Predicated region
        $region45: #{tpu_custom_call.1} parent=39 // pred_check
          %p1476 = pneg %p194
        $region46: #{tpu_custom_call.1} parent=39 // pred_check_branch
          %1478 = sbr.rel (%p1476) target = $region48
        $region47: #{tpu_custom_call.1} parent=39 // pred_region
          %s1480 = ssub.s32 16, 16
          %1481 = vsyncadd %s1454, %s1480
          %s1482 = smul.addr %s28, 2
          %s1483 = sadd.s32 %s29, %s1482
          %s1484 = smul.addr %s1483, 16
          %s1485 = scalar_lea.hbm %s6, %s1484
          %s1487 = sshll.u32 %s1456, 4
          %s1488 = int_to_ptr.vmem [resolvable:$true] %s1487
          %1490 = dma.vmem_to_hbm [thread:$0]  %s1488, 16, %s1485, %s1454
        $region48: #{tpu_custom_call.1} parent=39 // pred_fallthru
          _
      $region40: #{tpu_custom_call.1} parent=5 // pred_fallthru
        _
      %p1491 = scmp.le.s32.totalorder 2, %s19
      // Predicated region
      $region49: #{tpu_custom_call.1} parent=5 // pred_check
        %p1492 = pneg %p1491
      $region50: #{tpu_custom_call.1} parent=5 // pred_check_branch
        %1494 = sbr.rel (%p1492) target = $region52
      $region51: #{tpu_custom_call.1} parent=5 // pred_region
        %s1495 = ssub.s32 %s19, 2
        // Predicated region
        $region53: #{tpu_custom_call.1} parent=51 // pred_check
          %p1496 = pneg %p172
        $region54: #{tpu_custom_call.1} parent=51 // pred_check_branch
          %1498 = sbr.rel (%p1496) target = $region56
        $region55: #{tpu_custom_call.1} parent=51 // pred_region
          %s1499 = sand.u32 %s157, 1
          %s1500 = scalar_lea.sflag [#allocation3], %s1499
          %s1501 = sand.u32 %s157, 1
          %s1502 = smul.addr %s1501, 64
          %s1503 = scalar_lea.vmem [#allocation2], %s1502
          %1504 = dma.done %s1500, 1024
        $region56: #{tpu_custom_call.1} parent=51 // pred_fallthru
          _
        // Predicated region
        $region57: #{tpu_custom_call.1} parent=51 // pred_check
          %p1505 = pneg %p200
        $region58: #{tpu_custom_call.1} parent=51 // pred_check_branch
          %1507 = sbr.rel (%p1505) target = $region60
        $region59: #{tpu_custom_call.1} parent=51 // pred_region
          %s1508 = sand.u32 %s185, 1
          %s1509 = scalar_lea.sflag [#allocation5], %s1508
          %s1510 = sand.u32 %s185, 1
          %s1511 = scalar_lea.vmem [#allocation4], %s1510
          %1512 = dma.done %s1509, 16
        $region60: #{tpu_custom_call.1} parent=51 // pred_fallthru
          _
      $region52: #{tpu_custom_call.1} parent=5 // pred_fallthru
        _
    $region6: #{tpu_custom_call.1} parent=1 // loop_footer
      %s23 = sadd.s32 1, %s19
    $region7: #{tpu_custom_call.1} parent=1 // loop_footer_branch
      %18 = sbr.rel target = $region3
    $region8: #{tpu_custom_call.1} parent=1 // loop_exit
      _
    %1513 = vsyncpa [#allocation3], 1
    %s1514 = scalar_lea.sflag [#allocation3], 1
    %1515 = vsyncpa %s1514, 1
    %1516 = vsyncpa [#allocation5], 1
    %s1517 = scalar_lea.sflag [#allocation5], 1
    %1518 = vsyncpa %s1517, 1

</llo_original>
